<compile_context>
chip_gen: v7x
topology: tpu7x:2x2x1
jax: 0.10.0
libtpu: 0.0.40
codegen_flags: <defaults>
</compile_context>

<pallas_src>
import functools
import math

import jax
import jax.numpy as jnp
from jax import lax
from jax.experimental import pallas as pl
from jax.experimental.pallas import tpu as pltpu


# ----------------------------- kernel ----------------------------------------


def linformer_kernel(x_ref, wq_ref, bq_ref, wkv_ref, bkv_ref,
                     we_ref, be_ref, wf_ref, bf_ref, mask_ref,
                     o_ref, kp_sc, vp_sc, *, num_heads, head_dim, q_tile):
    """Grid = (batch, q-tile). Producer step (s==0) builds head-major Kp/Vp scratch;
    every step runs the Q projection + head-batched attention for one q-row tile."""
    H = num_heads * head_dim
    s_idx = pl.program_id(1)

    # ---- producer: once per batch, Linformer-project K/V for every head -------
    @pl.when(s_idx == 0)
    def _project_kv():
        m = mask_ref[...] / 10000.0 + 1.0                       # [S,1] f32 (1 keep / 0 drop)
        x = x_ref[...].astype(jnp.bfloat16)                     # [S,H]  bf16 MXU feed
        kv = (jnp.dot(x, wkv_ref[...], preferred_element_type=jnp.float32)
              + bkv_ref[...])                                   # [S,2H] f32
        k = kv[:, :H] * m                                       # mask K only (V unmasked)
        v = kv[:, H:]
        # E/F sequence projections for ALL heads in one [Kp,S] @ [S,H] matmul each.
        # (the 1/sqrt(d) score scale is pre-folded into we/be at prep time.)
        kp = (jnp.dot(we_ref[...], k.astype(jnp.bfloat16),
                      preferred_element_type=jnp.float32) + be_ref[...])   # [Kp,H]
        vp = (jnp.dot(wf_ref[...], v.astype(jnp.bfloat16),
                      preferred_element_type=jnp.float32) + bf_ref[...])   # [Kp,H]
        # One relayout to head-major [nH,Kp,d]; reused by every q-tile of this batch.
        kp_sc[...] = pltpu.einshape(
            "khd->hkd", kp.reshape(-1, num_heads, head_dim)).astype(jnp.bfloat16)
        vp_sc[...] = pltpu.einshape(
            "khd->hkd", vp.reshape(-1, num_heads, head_dim)).astype(jnp.bfloat16)

    # ---- per q-tile: Q projection + head-batched attention --------------------
    q0 = pl.multiple_of(s_idx * q_tile, q_tile)
    m_q = mask_ref[pl.ds(q0, q_tile), :] / 10000.0 + 1.0        # [tq,1] f32
    xq = x_ref[pl.ds(q0, q_tile), :].astype(jnp.bfloat16)       # [tq,H]
    q = (jnp.dot(xq, wq_ref[...], preferred_element_type=jnp.float32)
         + bq_ref[...]) * m_q                                   # [tq,H] f32, masked
    qh = pltpu.einshape(
        "shd->hsd", q.reshape(q_tile, num_heads, head_dim)).astype(jnp.bfloat16)

    # scores: [nH,tq,d] x [nH,Kp,d] -> [nH,tq,Kp]  (scale folded into we/be)
    s = lax.dot_general(qh, kp_sc[...], (((2,), (2,)), ((0,), (0,))),
                        preferred_element_type=jnp.float32)
    s_max = jnp.max(s, axis=-1, keepdims=True)
    p = jnp.exp(s - s_max)
    p = p * pl.reciprocal(jnp.sum(p, axis=-1, keepdims=True), approx=True)
    # TODO(synk): attention_probs dropout / head_mask skipped (identity in eval mode).
    ctx = lax.dot_general(p.astype(jnp.bfloat16), vp_sc[...],
                          (((2,), (1,)), ((0,), (0,))),
                          preferred_element_type=jnp.float32)   # [nH,tq,d] f32

    # Merge heads back to the lane-dense [tq,H] slab: one relayout + one store.
    merged = pltpu.einshape("hsd->shd", ctx).reshape(q_tile, H)
    o_ref[...] = merged.astype(o_ref.dtype)


# ----------------------------- parameter prep ---------------------------------


def prepare_params(params, num_heads, *, compute_dtype=jnp.bfloat16):
    """One-time packing / casting of the nn.Linear weights (hoisted out of the
    per-call wrapper so no concat / scale-fold / cast runs on the forward path)."""
    H = params["wq"].shape[0]
    d = H // num_heads
    KP = params["we"].shape[0]
    scale = 1.0 / math.sqrt(d)
    return {
        "wq": params["wq"].astype(compute_dtype),                            # [H,H]
        "bq": params["bq"].reshape(1, H).astype(jnp.float32),
        "wkv": jnp.concatenate([params["wk"], params["wv"]], axis=1
                               ).astype(compute_dtype),                      # [H,2H]
        "bkv": jnp.concatenate([params["bk"], params["bv"]]
                               ).reshape(1, 2 * H).astype(jnp.float32),
        # fold the 1/sqrt(d) attention scale into E: kp only ever feeds the scores.
        "we": (params["we"] * scale).astype(compute_dtype),                  # [KP,S]
        "be": (params["be"] * scale).reshape(KP, 1).astype(jnp.float32),
        "wf": params["wf"].astype(compute_dtype),                            # [KP,S]
        "bf": params["bf"].reshape(KP, 1).astype(jnp.float32),
    }


# ----------------------------- wrapper -----------------------------------------


def linformer_self_attention(hidden_states, prepared, attention_mask, num_heads,
                             *, q_tile=None):
    """hidden_states: [B,S,H]; attention_mask: additive BERT mask [B,1,1,S] or None."""
    B, S, H = hidden_states.shape
    d = H // num_heads
    KP = prepared["we"].shape[0]
    dtype = hidden_states.dtype

    if q_tile is None:
        q_tile = min(S, 128)
    assert S % q_tile == 0 and H % num_heads == 0

    if attention_mask is None:
        mask_bs1 = jnp.zeros((B, S, 1), jnp.float32)
    else:
        # [B,1,1,S] -> [B,S,1] is a pure reshape over size-1 dims (no transpose).
        mask_bs1 = attention_mask.reshape(B, S, 1).astype(jnp.float32)

    kernel = functools.partial(linformer_kernel, num_heads=num_heads,
                               head_dim=d, q_tile=q_tile)

    # Constant-index weights/biases: single-buffered residents (no wasted 2x VMEM).
    resident = dict(pipeline_mode=pl.Buffered(1))

    # VMEM budget: single-buffered weights + double-buffered x/mask/out blocks +
    # transient f32 intermediates, with margin; clamped so it is legal on every
    # generation (>= 16/32 MiB scoped defaults, <= v7x's 64 MiB physical).
    w_bytes = (H * 3 * H + 2 * KP * S) * 2 + (3 * H + 2 * KP) * 4
    io_bytes = 2 * (S * H * 4 + S * 4 + q_tile * H * 4)
    tmp_bytes = (S * 3 * H + 4 * KP * H + 4 * num_heads * q_tile * KP) * 4
    vmem_limit = int(min(max(2 * (w_bytes + io_bytes + tmp_bytes), 32 * 2**20),
                         56 * 2**20))

    cost = pl.CostEstimate(
        flops=int(6 * B * S * H * H + 8 * B * S * KP * H),
        transcendentals=int(B * num_heads * S * KP),
        bytes_accessed=int(2 * B * S * H * 4 + B * S * 4 + w_bytes),
    )

    return pl.pallas_call(
        kernel,
        grid=(B, S // q_tile),
        in_specs=[
            pl.BlockSpec((None, S, H), lambda b, s: (b, 0, 0)),            # x (full rows/batch)
            pl.BlockSpec((H, H), lambda b, s: (0, 0), **resident),         # Wq
            pl.BlockSpec((1, H), lambda b, s: (0, 0), **resident),         # bq
            pl.BlockSpec((H, 2 * H), lambda b, s: (0, 0), **resident),     # packed Wkv
            pl.BlockSpec((1, 2 * H), lambda b, s: (0, 0), **resident),     # packed bkv
            pl.BlockSpec((KP, S), lambda b, s: (0, 0), **resident),        # E weight (pre-scaled)
            pl.BlockSpec((KP, 1), lambda b, s: (0, 0), **resident),        # E bias   (pre-scaled)
            pl.BlockSpec((KP, S), lambda b, s: (0, 0), **resident),        # F weight
            pl.BlockSpec((KP, 1), lambda b, s: (0, 0), **resident),        # F bias
            pl.BlockSpec((None, S, 1), lambda b, s: (b, 0, 0)),            # additive mask
        ],
        out_specs=pl.BlockSpec((None, q_tile, H), lambda b, s: (b, s, 0)),
        out_shape=jax.ShapeDtypeStruct((B, S, H), dtype),
        scratch_shapes=[
            pltpu.VMEM((num_heads, KP, d), jnp.bfloat16),   # head-major Kp (per batch)
            pltpu.VMEM((num_heads, KP, d), jnp.bfloat16),   # head-major Vp (per batch)
        ],
        compiler_params=pltpu.CompilerParams(
            dimension_semantics=("parallel", "arbitrary"),
            vmem_limit_bytes=vmem_limit),
        cost_estimate=cost,
    )(hidden_states, prepared["wq"], prepared["bq"], prepared["wkv"],
      prepared["bkv"], prepared["we"], prepared["be"], prepared["wf"],
      prepared["bf"], mask_bs1)


# ----------------------------- reference (plain JAX, f32) ----------------------


def reference_linformer(hidden_states, params, attention_mask, num_heads):
    B, S, H = hidden_states.shape
    d = H // num_heads
    q = hidden_states @ params["wq"] + params["bq"]
    k = hidden_states @ params["wk"] + params["bk"]
    v = hidden_states @ params["wv"] + params["bv"]

    def split(t):
        return t.reshape(B, S, num_heads, d).transpose(0, 2, 1, 3)

    qh, kh, vh = split(q), split(k), split(v)
    if attention_mask is not None:
        m = jnp.swapaxes(attention_mask, -1, -2) / 10000.0 + 1.0   # [B,1,S,1]
        qh = qh * m
        kh = kh * m
    kp = jnp.einsum("ps,bhsd->bhpd", params["we"], kh) + params["be"][None, None, :, None]
    vp = jnp.einsum("ps,bhsd->bhpd", params["wf"], vh) + params["bf"][None, None, :, None]
    scores = jnp.einsum("bhsd,bhpd->bhsp", qh, kp) / math.sqrt(d)
    probs = jax.nn.softmax(scores, axis=-1)
    ctx = jnp.einsum("bhsp,bhpd->bhsd", probs, vp)
    return ctx.transpose(0, 2, 1, 3).reshape(B, S, H)


# ----------------------------- main --------------------------------------------


if __name__ == "__main__":
    # Config: hidden_size=32, num_attention_heads=4 (head_dim=8),
    #         sequence_len=16, projection_length=8, projection_bias=True.
    B, S, H, NH, KP = 2, 16, 32, 4, 8

    key = jax.random.PRNGKey(0)
    ks = jax.random.split(key, 11)

    x = jax.random.normal(ks[0], (B, S, H), dtype=jnp.float32)

    # nn.Linear weights are [out, in]; store pre-transposed [in, out] so kernels
    # compute x @ W.
    def linear_w(k, n_in, n_out, scl):
        return (scl * jax.random.normal(k, (n_out, n_in), dtype=jnp.float32)).T

    params = {
        "wq": linear_w(ks[1], H, H, 0.05),
        "bq": 0.01 * jax.random.normal(ks[2], (H,), jnp.float32),
        "wk": linear_w(ks[3], H, H, 0.05),
        "bk": 0.01 * jax.random.normal(ks[4], (H,), jnp.float32),
        "wv": linear_w(ks[5], H, H, 0.05),
        "bv": 0.01 * jax.random.normal(ks[6], (H,), jnp.float32),
        # E/F: Linear(sequence_len -> projection_length); weight stored [KP, S].
        "we": 0.2 * jax.random.normal(ks[7], (KP, S), jnp.float32),
        "be": 0.01 * jax.random.normal(ks[8], (KP,), jnp.float32),
        "wf": 0.2 * jax.random.normal(ks[9], (KP, S), jnp.float32),
        "bf": 0.01 * jax.random.normal(ks[10], (KP,), jnp.float32),
    }

    # BERT-style extended additive mask [B,1,1,S]: mask out the last 3 tokens of batch 1.
    keep = jnp.ones((B, S), jnp.float32).at[1, -3:].set(0.0)
    attention_mask = (1.0 - keep)[:, None, None, :] * -10000.0

    prepared = prepare_params(params, NH)   # one-time pack / scale-fold / bf16 cast
    # q_tile=8 exercises the two-tile producer/consumer path at this toy size.
    out = linformer_self_attention(x, prepared, attention_mask, NH, q_tile=8)
    out = jax.block_until_ready(out)

    ref = reference_linformer(x, params, attention_mask, NH)
    assert out.shape == (B, S, H)
    # bf16 MXU operands (f32 accumulation / f32 softmax) + approx reciprocal ->
    # compare against the f32 reference with a correspondingly loose tolerance.
    assert jnp.allclose(out, ref, atol=2e-2, rtol=2e-2), "mismatch vs reference"

    print("KERNEL_OK")
</pallas_src>

<mosaic_0001>
module attributes {stable_mosaic.version = 11 : i64} {
  func.func @linformer_kernel(%arg0: i32, %arg1: i32, %arg2: memref<1x16x32xf32, #tpu.memory_space<vmem>>, %arg3: memref<32x32xbf16, #tpu.memory_space<vmem>>, %arg4: memref<1x32xf32, #tpu.memory_space<vmem>>, %arg5: memref<32x64xbf16, #tpu.memory_space<vmem>>, %arg6: memref<1x64xf32, #tpu.memory_space<vmem>>, %arg7: memref<8x16xbf16, #tpu.memory_space<vmem>>, %arg8: memref<8x1xf32, #tpu.memory_space<vmem>>, %arg9: memref<8x16xbf16, #tpu.memory_space<vmem>>, %arg10: memref<8x1xf32, #tpu.memory_space<vmem>>, %arg11: memref<1x16x1xf32, #tpu.memory_space<vmem>>, %arg12: memref<1x8x32xf32, #tpu.memory_space<vmem>>, %arg13: memref<4x8x8xbf16, #tpu.memory_space<vmem>>, %arg14: memref<4x8x8xbf16, #tpu.memory_space<vmem>>) attributes {dimension_semantics = [#tpu.dimension_semantics<parallel>, #tpu.dimension_semantics<arbitrary>], iteration_bounds = array<i64: 2, 2>, scalar_prefetch = 0 : i64, scratch_operands = 2 : i64, tpu.core_type = #tpu.core_type<tc>, window_params = [{transform_indices = @transform_0, window_bounds = array<i64: 1, 16, 32>}, {pipeline_mode = #tpu.pipeline_mode<synchronous>, transform_indices = @transform_1, window_bounds = array<i64: 32, 32>}, {pipeline_mode = #tpu.pipeline_mode<synchronous>, transform_indices = @transform_2, window_bounds = array<i64: 1, 32>}, {pipeline_mode = #tpu.pipeline_mode<synchronous>, transform_indices = @transform_3, window_bounds = array<i64: 32, 64>}, {pipeline_mode = #tpu.pipeline_mode<synchronous>, transform_indices = @transform_4, window_bounds = array<i64: 1, 64>}, {pipeline_mode = #tpu.pipeline_mode<synchronous>, transform_indices = @transform_5, window_bounds = array<i64: 8, 16>}, {pipeline_mode = #tpu.pipeline_mode<synchronous>, transform_indices = @transform_6, window_bounds = array<i64: 8, 1>}, {pipeline_mode = #tpu.pipeline_mode<synchronous>, transform_indices = @transform_7, window_bounds = array<i64: 8, 16>}, {pipeline_mode = #tpu.pipeline_mode<synchronous>, transform_indices = @transform_8, window_bounds = array<i64: 8, 1>}, {transform_indices = @transform_9, window_bounds = array<i64: 1, 16, 1>}, {transform_indices = @transform_10, window_bounds = array<i64: 1, 8, 32>}]} {
    %c0_i32 = arith.constant 0 : i32
    %0 = arith.cmpi eq, %arg1, %c0_i32 : i32
    %1 = arith.extui %0 : i1 to i32
    %c0_i32_0 = arith.constant 0 : i32
    %2 = arith.cmpi ne, %1, %c0_i32_0 : i32
    scf.if %2 {
      %c0_23 = arith.constant 0 : index
      %c0_24 = arith.constant 0 : index
      %c0_25 = arith.constant 0 : index
      %46 = vector.load %arg11[%c0_23, %c0_24, %c0_25] : memref<1x16x1xf32, #tpu.memory_space<vmem>>, vector<1x16x1xf32>
      %47 = vector.shape_cast %46 : vector<1x16x1xf32> to vector<16x1xf32>
      %cst_26 = arith.constant 1.000000e+04 : f32
      %48 = vector.broadcast %cst_26 : f32 to vector<16x1xf32>
      %49 = arith.divf %47, %48 : vector<16x1xf32>
      %cst_27 = arith.constant 1.000000e+00 : f32
      %50 = vector.broadcast %cst_27 : f32 to vector<16x1xf32>
      %51 = arith.addf %49, %50 : vector<16x1xf32>
      %c0_28 = arith.constant 0 : index
      %c0_29 = arith.constant 0 : index
      %c0_30 = arith.constant 0 : index
      %52 = vector.load %arg2[%c0_28, %c0_29, %c0_30] : memref<1x16x32xf32, #tpu.memory_space<vmem>>, vector<1x16x32xf32>
      %53 = vector.shape_cast %52 : vector<1x16x32xf32> to vector<16x32xf32>
      %54 = arith.truncf %53 : vector<16x32xf32> to vector<16x32xbf16>
      %c0_31 = arith.constant 0 : index
      %c0_32 = arith.constant 0 : index
      %55 = vector.load %arg5[%c0_31, %c0_32] : memref<32x64xbf16, #tpu.memory_space<vmem>>, vector<32x64xbf16>
      %cst_33 = arith.constant dense<0.000000e+00> : vector<16x64xf32>
      %56 = tpu.matmul %54, %55, %cst_33 {dimension_numbers = #tpu.dot_dimension_numbers<[1], [0], [0], [1], [0, 0, 1, 1], [], []>} : vector<16x32xbf16>, vector<32x64xbf16>, vector<16x64xf32> -> vector<16x64xf32>
      %c0_34 = arith.constant 0 : index
      %c0_35 = arith.constant 0 : index
      %57 = vector.load %arg6[%c0_34, %c0_35] : memref<1x64xf32, #tpu.memory_space<vmem>>, vector<1x64xf32>
      %58 = vector.broadcast %57 : vector<1x64xf32> to vector<16x64xf32>
      %59 = arith.addf %56, %58 : vector<16x64xf32>
      %60 = vector.extract_strided_slice %59 {offsets = [0, 0], sizes = [16, 32], strides = [1, 1]} : vector<16x64xf32> to vector<16x32xf32>
      %61 = vector.broadcast %51 : vector<16x1xf32> to vector<16x32xf32>
      %62 = arith.mulf %60, %61 : vector<16x32xf32>
      %63 = vector.extract_strided_slice %59 {offsets = [0, 32], sizes = [16, 32], strides = [1, 1]} : vector<16x64xf32> to vector<16x32xf32>
      %c0_36 = arith.constant 0 : index
      %c0_37 = arith.constant 0 : index
      %64 = vector.load %arg7[%c0_36, %c0_37] : memref<8x16xbf16, #tpu.memory_space<vmem>>, vector<8x16xbf16>
      %65 = arith.truncf %62 : vector<16x32xf32> to vector<16x32xbf16>
      %cst_38 = arith.constant dense<0.000000e+00> : vector<8x32xf32>
      %66 = tpu.matmul %64, %65, %cst_38 {dimension_numbers = #tpu.dot_dimension_numbers<[1], [0], [0], [1], [0, 0, 1, 1], [], []>} : vector<8x16xbf16>, vector<16x32xbf16>, vector<8x32xf32> -> vector<8x32xf32>
      %c0_39 = arith.constant 0 : index
      %c0_40 = arith.constant 0 : index
      %67 = vector.load %arg8[%c0_39, %c0_40] : memref<8x1xf32, #tpu.memory_space<vmem>>, vector<8x1xf32>
      %68 = vector.broadcast %67 : vector<8x1xf32> to vector<8x32xf32>
      %69 = arith.addf %66, %68 : vector<8x32xf32>
      %c0_41 = arith.constant 0 : index
      %c0_42 = arith.constant 0 : index
      %70 = vector.load %arg9[%c0_41, %c0_42] : memref<8x16xbf16, #tpu.memory_space<vmem>>, vector<8x16xbf16>
      %71 = arith.truncf %63 : vector<16x32xf32> to vector<16x32xbf16>
      %cst_43 = arith.constant dense<0.000000e+00> : vector<8x32xf32>
      %72 = tpu.matmul %70, %71, %cst_43 {dimension_numbers = #tpu.dot_dimension_numbers<[1], [0], [0], [1], [0, 0, 1, 1], [], []>} : vector<8x16xbf16>, vector<16x32xbf16>, vector<8x32xf32> -> vector<8x32xf32>
      %c0_44 = arith.constant 0 : index
      %c0_45 = arith.constant 0 : index
      %73 = vector.load %arg10[%c0_44, %c0_45] : memref<8x1xf32, #tpu.memory_space<vmem>>, vector<8x1xf32>
      %74 = vector.broadcast %73 : vector<8x1xf32> to vector<8x32xf32>
      %75 = arith.addf %72, %74 : vector<8x32xf32>
      %76 = vector.shape_cast %69 : vector<8x32xf32> to vector<8x4x8xf32>
      %77 = tpu.transpose %76, [1, 0, 2] : vector<8x4x8xf32> -> vector<4x8x8xf32>
      %78 = arith.truncf %77 : vector<4x8x8xf32> to vector<4x8x8xbf16>
      %c0_46 = arith.constant 0 : index
      %c0_47 = arith.constant 0 : index
      %c0_48 = arith.constant 0 : index
      %79 = vector.load %arg13[%c0_46, %c0_47, %c0_48] : memref<4x8x8xbf16, #tpu.memory_space<vmem>>, vector<4x8x8xbf16>
      tpu.vector_store %arg13[%c0_46, %c0_47, %c0_48], %78 {strides = array<i32>} : memref<4x8x8xbf16, #tpu.memory_space<vmem>>, vector<4x8x8xbf16>,
      %80 = vector.shape_cast %75 : vector<8x32xf32> to vector<8x4x8xf32>
      %81 = tpu.transpose %80, [1, 0, 2] : vector<8x4x8xf32> -> vector<4x8x8xf32>
      %82 = arith.truncf %81 : vector<4x8x8xf32> to vector<4x8x8xbf16>
      %c0_49 = arith.constant 0 : index
      %c0_50 = arith.constant 0 : index
      %c0_51 = arith.constant 0 : index
      %83 = vector.load %arg14[%c0_49, %c0_50, %c0_51] : memref<4x8x8xbf16, #tpu.memory_space<vmem>>, vector<4x8x8xbf16>
      tpu.vector_store %arg14[%c0_49, %c0_50, %c0_51], %82 {strides = array<i32>} : memref<4x8x8xbf16, #tpu.memory_space<vmem>>, vector<4x8x8xbf16>,
    } else {
    }
    %c8_i32 = arith.constant 8 : i32
    %3 = arith.muli %arg1, %c8_i32 : i32
    %4 = tpu.assume_multiple %3, 8 : i32
    %c0 = arith.constant 0 : index
    %5 = arith.index_cast %4 : i32 to index
    %c0_1 = arith.constant 0 : index
    %6 = vector.load %arg11[%c0, %5, %c0_1] : memref<1x16x1xf32, #tpu.memory_space<vmem>>, vector<1x8x1xf32>
    %7 = vector.shape_cast %6 : vector<1x8x1xf32> to vector<8x1xf32>
    %cst = arith.constant 1.000000e+04 : f32
    %8 = vector.broadcast %cst : f32 to vector<8x1xf32>
    %9 = arith.divf %7, %8 : vector<8x1xf32>
    %cst_2 = arith.constant 1.000000e+00 : f32
    %10 = vector.broadcast %cst_2 : f32 to vector<8x1xf32>
    %11 = arith.addf %9, %10 : vector<8x1xf32>
    %c0_3 = arith.constant 0 : index
    %12 = arith.index_cast %4 : i32 to index
    %c0_4 = arith.constant 0 : index
    %13 = vector.load %arg2[%c0_3, %12, %c0_4] : memref<1x16x32xf32, #tpu.memory_space<vmem>>, vector<1x8x32xf32>
    %14 = vector.shape_cast %13 : vector<1x8x32xf32> to vector<8x32xf32>
    %15 = arith.truncf %14 : vector<8x32xf32> to vector<8x32xbf16>
    %c0_5 = arith.constant 0 : index
    %c0_6 = arith.constant 0 : index
    %16 = vector.load %arg3[%c0_5, %c0_6] : memref<32x32xbf16, #tpu.memory_space<vmem>>, vector<32x32xbf16>
    %cst_7 = arith.constant dense<0.000000e+00> : vector<8x32xf32>
    %17 = tpu.matmul %15, %16, %cst_7 {dimension_numbers = #tpu.dot_dimension_numbers<[1], [0], [0], [1], [0, 0, 1, 1], [], []>} : vector<8x32xbf16>, vector<32x32xbf16>, vector<8x32xf32> -> vector<8x32xf32>
    %c0_8 = arith.constant 0 : index
    %c0_9 = arith.constant 0 : index
    %18 = vector.load %arg4[%c0_8, %c0_9] : memref<1x32xf32, #tpu.memory_space<vmem>>, vector<1x32xf32>
    %19 = vector.broadcast %18 : vector<1x32xf32> to vector<8x32xf32>
    %20 = arith.addf %17, %19 : vector<8x32xf32>
    %21 = vector.broadcast %11 : vector<8x1xf32> to vector<8x32xf32>
    %22 = arith.mulf %20, %21 : vector<8x32xf32>
    %23 = vector.shape_cast %22 : vector<8x32xf32> to vector<8x4x8xf32>
    %24 = tpu.transpose %23, [1, 0, 2] : vector<8x4x8xf32> -> vector<4x8x8xf32>
    %25 = arith.truncf %24 : vector<4x8x8xf32> to vector<4x8x8xbf16>
    %c0_10 = arith.constant 0 : index
    %c0_11 = arith.constant 0 : index
    %c0_12 = arith.constant 0 : index
    %26 = vector.load %arg13[%c0_10, %c0_11, %c0_12] : memref<4x8x8xbf16, #tpu.memory_space<vmem>>, vector<4x8x8xbf16>
    %cst_13 = arith.constant dense<0.000000e+00> : vector<4x8x8xf32>
    %27 = tpu.matmul %25, %26, %cst_13 {dimension_numbers = #tpu.dot_dimension_numbers<[2], [2], [1], [1], [0, 0, 0, 1, 1, 1], [0], [0]>} : vector<4x8x8xbf16>, vector<4x8x8xbf16>, vector<4x8x8xf32> -> vector<4x8x8xf32>
    %cst_14 = arith.constant dense<0xFF800000> : vector<4x8xf32>
    %28 = vector.multi_reduction <maximumf>, %27, %cst_14 [2] : vector<4x8x8xf32> to vector<4x8xf32>
    %29 = vector.shape_cast %28 : vector<4x8xf32> to vector<4x8x1xf32>
    %30 = vector.broadcast %29 : vector<4x8x1xf32> to vector<4x8x8xf32>
    %31 = arith.subf %27, %30 : vector<4x8x8xf32>
    %32 = math.exp %31 : vector<4x8x8xf32>
    %cst_15 = arith.constant dense<0.000000e+00> : vector<4x8xf32>
    %33 = vector.multi_reduction <add>, %32, %cst_15 [2] : vector<4x8x8xf32> to vector<4x8xf32>
    %34 = vector.shape_cast %33 : vector<4x8xf32> to vector<4x8x1xf32>
    %35 = tpu.reciprocal %34 {approx = true} : vector<4x8x1xf32> -> vector<4x8x1xf32>
    %36 = vector.broadcast %35 : vector<4x8x1xf32> to vector<4x8x8xf32>
    %37 = arith.mulf %32, %36 : vector<4x8x8xf32>
    %38 = arith.truncf %37 : vector<4x8x8xf32> to vector<4x8x8xbf16>
    %c0_16 = arith.constant 0 : index
    %c0_17 = arith.constant 0 : index
    %c0_18 = arith.constant 0 : index
    %39 = vector.load %arg14[%c0_16, %c0_17, %c0_18] : memref<4x8x8xbf16, #tpu.memory_space<vmem>>, vector<4x8x8xbf16>
    %cst_19 = arith.constant dense<0.000000e+00> : vector<4x8x8xf32>
    %40 = tpu.matmul %38, %39, %cst_19 {dimension_numbers = #tpu.dot_dimension_numbers<[2], [1], [1], [2], [0, 0, 0, 1, 1, 2], [0], [0]>} : vector<4x8x8xbf16>, vector<4x8x8xbf16>, vector<4x8x8xf32> -> vector<4x8x8xf32>
    %41 = tpu.transpose %40, [1, 0, 2] : vector<4x8x8xf32> -> vector<8x4x8xf32>
    %42 = vector.shape_cast %41 : vector<8x4x8xf32> to vector<8x32xf32>
    %c0_20 = arith.constant 0 : index
    %c0_21 = arith.constant 0 : index
    %c0_22 = arith.constant 0 : index
    %43 = vector.load %arg12[%c0_20, %c0_21, %c0_22] : memref<1x8x32xf32, #tpu.memory_space<vmem>>, vector<1x8x32xf32>
    %44 = vector.shape_cast %43 : vector<1x8x32xf32> to vector<8x32xf32>
    %45 = vector.shape_cast %42 : vector<8x32xf32> to vector<1x8x32xf32>
    tpu.vector_store %arg12[%c0_20, %c0_21, %c0_22], %45 {strides = array<i32>} : memref<1x8x32xf32, #tpu.memory_space<vmem>>, vector<1x8x32xf32>,
    return
  }
  func.func @transform_0(%arg0: i32, %arg1: i32) -> (i32, i32, i32) {
    %c0_i32 = arith.constant 0 : i32
    %c0_i32_0 = arith.constant 0 : i32
    %c0_i32_1 = arith.constant 0 : i32
    return %arg0, %c0_i32, %c0_i32_0 : i32, i32, i32
  }
  func.func @transform_1(%arg0: i32, %arg1: i32) -> (i32, i32) {
    %c0_i32 = arith.constant 0 : i32
    %c0_i32_0 = arith.constant 0 : i32
    %c0_i32_1 = arith.constant 0 : i32
    return %c0_i32, %c0_i32_0 : i32, i32
  }
  func.func @transform_2(%arg0: i32, %arg1: i32) -> (i32, i32) {
    %c0_i32 = arith.constant 0 : i32
    %c0_i32_0 = arith.constant 0 : i32
    %c0_i32_1 = arith.constant 0 : i32
    return %c0_i32, %c0_i32_0 : i32, i32
  }
  func.func @transform_3(%arg0: i32, %arg1: i32) -> (i32, i32) {
    %c0_i32 = arith.constant 0 : i32
    %c0_i32_0 = arith.constant 0 : i32
    %c0_i32_1 = arith.constant 0 : i32
    return %c0_i32, %c0_i32_0 : i32, i32
  }
  func.func @transform_4(%arg0: i32, %arg1: i32) -> (i32, i32) {
    %c0_i32 = arith.constant 0 : i32
    %c0_i32_0 = arith.constant 0 : i32
    %c0_i32_1 = arith.constant 0 : i32
    return %c0_i32, %c0_i32_0 : i32, i32
  }
  func.func @transform_5(%arg0: i32, %arg1: i32) -> (i32, i32) {
    %c0_i32 = arith.constant 0 : i32
    %c0_i32_0 = arith.constant 0 : i32
    %c0_i32_1 = arith.constant 0 : i32
    return %c0_i32, %c0_i32_0 : i32, i32
  }
  func.func @transform_6(%arg0: i32, %arg1: i32) -> (i32, i32) {
    %c0_i32 = arith.constant 0 : i32
    %c0_i32_0 = arith.constant 0 : i32
    %c0_i32_1 = arith.constant 0 : i32
    return %c0_i32, %c0_i32_0 : i32, i32
  }
  func.func @transform_7(%arg0: i32, %arg1: i32) -> (i32, i32) {
    %c0_i32 = arith.constant 0 : i32
    %c0_i32_0 = arith.constant 0 : i32
    %c0_i32_1 = arith.constant 0 : i32
    return %c0_i32, %c0_i32_0 : i32, i32
  }
  func.func @transform_8(%arg0: i32, %arg1: i32) -> (i32, i32) {
    %c0_i32 = arith.constant 0 : i32
    %c0_i32_0 = arith.constant 0 : i32
    %c0_i32_1 = arith.constant 0 : i32
    return %c0_i32, %c0_i32_0 : i32, i32
  }
  func.func @transform_9(%arg0: i32, %arg1: i32) -> (i32, i32, i32) {
    %c0_i32 = arith.constant 0 : i32
    %c0_i32_0 = arith.constant 0 : i32
    %c0_i32_1 = arith.constant 0 : i32
    return %arg0, %c0_i32, %c0_i32_0 : i32, i32, i32
  }
  func.func @transform_10(%arg0: i32, %arg1: i32) -> (i32, i32, i32) {
    %c0_i32 = arith.constant 0 : i32
    %c0_i32_0 = arith.constant 0 : i32
    return %arg0, %arg1, %c0_i32 : i32, i32, i32
  }
}

</mosaic_0001>

<llo_original>
// kernel: tpu_custom_call.1
$region0: #{tpu_custom_call.1}
  #allocation0 [shape = 'u32[]', space=smem, size = 0x4, offset = 0x4, fixed_abs, tag = 'smem constant byte address 0x4 - core index']
  #allocation1 [shape = 'u32[144,128]{1,0:T(1,128)}', space=vmem, size = 0x12000, scoped, tag = 'internal scratch']
  #allocation2 [shape = 'bf16[4,8,8]{2,1,0:T(8,128)(2,1)}', space=vmem, size = 0x2000, scoped, tag = 'scratch operand']
  #allocation3 [shape = 'bf16[4,8,8]{2,1,0:T(8,128)(2,1)}', space=vmem, size = 0x2000, scoped, tag = 'scratch operand']
  %s0 = inlined_call_operand.vmem [shape: f32[2,16,32], index: 0, kind: input, shape index: {}]
  %s1 = inlined_call_operand.vmem [shape: bf16[32,32], index: 1, kind: input, shape index: {}]
  %s2 = inlined_call_operand.vmem [shape: f32[1,32], index: 2, kind: input, shape index: {}]
  %s3 = inlined_call_operand.hbm [shape: bf16[32,64], index: 3, kind: input, shape index: {}]
  %s4 = inlined_call_operand.vmem [shape: f32[1,64], index: 4, kind: input, shape index: {}]
  %s5 = inlined_call_operand.vmem [shape: bf16[8,16], index: 5, kind: input, shape index: {}]
  %s6 = inlined_call_operand.vmem [shape: f32[8,1], index: 6, kind: input, shape index: {}]
  %s7 = inlined_call_operand.vmem [shape: bf16[8,16], index: 7, kind: input, shape index: {}]
  %s8 = inlined_call_operand.vmem [shape: f32[8,1], index: 8, kind: input, shape index: {}]
  %s9 = inlined_call_operand.vmem [shape: f32[2,16,1], index: 9, kind: input, shape index: {}]
  %s10 = inlined_call_operand.hbm [shape: f32[2,16,32], index: 10, kind: output, shape index: {}]
  %s11 = sld [smem:[#allocation0]]
  $region81: #{tpu_custom_call.1} parent=0
    _
  %s13 = ssub.s32 1, %s11
  %s14 = scalar_select 0, %s13, %s11
  $region1: #{tpu_custom_call.1} parent=0
    #allocation4 [shape = 'u8[8192]{0}', space=vmem, size = 0x2000, scoped, tag = 'input window, operand 3, single buffered']
    #allocation5 [shape = 's32[2]{0}', space=sflag, size = 0x8, scoped, tag = 'scoped memory for tpu_custom_call.1']
    #allocation6 [shape = 's32[2]{0}', space=sflag, size = 0x8, scoped, tag = 'scoped memory for tpu_custom_call.1']
    #allocation7 [shape = 'u8[8192]{0}', space=vmem, size = 0x2000, scoped, tag = 'output window, operand 0']
    %15 = vsyncpa [#allocation5], 0
    %16 = vsyncpa [#allocation6], 0
    %s17 = scalar_lea.sflag [#allocation6], 1
    %18 = vsyncpa %s17, 0
    loop: start=0, step=1, limit=6
    $region2: #{tpu_custom_call.1} parent=1 // loop_pre_header
      _
    $region3: #{tpu_custom_call.1} parent=1 // loop_header
      %s20 = sphi 0, %s24
      %p21 = scmp.ge.s32.totalorder %s20, 6
      %s27 = sphi 0, %s39
      %s28 = sphi 0, %s35
      %s29 = sphi 0, %s27
      %s30 = sphi 0, %s28
      %s31 = sphi 0, %s29
      %s32 = sphi 0, %s30
      %s42 = sphi 0, %s44
      %s45 = sphi 0, %s42
      %s46 = sphi 0, %s45
      %s62 = sphi 0, %s46
      %s66 = sphi 0, %s66
      %s68 = sphi 0, %s66
      %s69 = sphi 0, %s68
      %s83 = sphi 0, %s69
      %s87 = sphi 0, %s87
      %s89 = sphi 0, %s87
      %s90 = sphi 0, %s89
      %s104 = sphi 0, %s90
      %s108 = sphi 0, %s108
      %s110 = sphi 0, %s108
      %s111 = sphi 0, %s110
      %s125 = sphi 0, %s111
      %s129 = sphi 0, %s129
      %s131 = sphi 0, %s129
      %s132 = sphi 0, %s131
      %s146 = sphi 0, %s132
      %s150 = sphi 0, %s150
      %s152 = sphi 0, %s150
      %s153 = sphi 0, %s152
      %s167 = sphi 0, %s153
      %s171 = sphi 0, %s171
      %s173 = sphi 0, %s171
      %s174 = sphi 0, %s173
      %s188 = sphi 0, %s174
      %s192 = sphi 0, %s192
      %s194 = sphi 0, %s192
      %s195 = sphi 0, %s194
      %s209 = sphi 0, %s195
      %s213 = sphi 0, %s213
      %s215 = sphi 0, %s213
      %s216 = sphi 0, %s215
      %s230 = sphi 0, %s216
      %s236 = sphi 0, %s238
      %s239 = sphi 0, %s236
      %s240 = sphi 0, %s239
      %s256 = sphi 0, %s240
      %s264 = sphi 0, %s266
      %s267 = sphi 0, %s264
      %s268 = sphi 0, %s267
      %s284 = sphi 0, %s268
    $region4: #{tpu_custom_call.1} parent=1 // loop_header_branch
      %23 = sbr.rel (%p21) target = $region8
    $region5: #{tpu_custom_call.1} parent=1 // loop_body
      %s25 = ssub.s32 %s20, 1
      %s26 = ssub.s32 %s20, 2
      %s33 = sadd.s32 1, %s28
      %p34 = scmp.ge.s32.totalorder %s33, 2
      %s35 = scalar_select %p34, 0, %s33
      %s36 = sadd.s32 1, %s27
      %s37 = scalar_select %p34, %s36, %s27
      %p38 = scmp.ge.s32.totalorder %s37, 2
      %s39 = scalar_select %p38, 0, %s37
      %s40 = ssub.s32 %s27, %s39
      %p41 = scmp.eq.s32.totalorder %s40, 0
      %s43 = sadd.s32 %s42, 1
      %s44 = scalar_select %p41, %s42, %s43
      %p47 = pneg %p41
      %p48 = scmp.eq.s32.totalorder %s20, 3
      %p49 = por %p47, %p48
      %p50 = scmp.ne.s32.totalorder %s42, %s45
      %p51 = scmp.eq.s32.totalorder %s20, 0
      %p52 = por %p50, %p51
      %p53 = scmp.ne.s32.totalorder %s42, %s45
      %p54 = scmp.eq.s32.totalorder %s25, 3
      %p55 = por %p53, %p54
      %p56 = scmp.ne.s32.totalorder %s45, %s46
      %p57 = scmp.eq.s32.totalorder %s25, 0
      %p58 = por %p56, %p57
      %p59 = scmp.ne.s32.totalorder %s45, %s46
      %p60 = scmp.eq.s32.totalorder %s26, 3
      %p61 = por %p59, %p60
      %p63 = scmp.ne.s32.totalorder %s46, %s62
      %p64 = scmp.eq.s32.totalorder %s26, 0
      %p65 = por %p63, %p64
      %s67 = sadd.s32 %s66, 1
      %p70 = scmp.eq.s32.totalorder %s20, 3
      %p71 = scmp.ne.s32.totalorder %s66, %s68
      %p72 = scmp.eq.s32.totalorder %s20, 0
      %p73 = por %p71, %p72
      %p74 = scmp.ne.s32.totalorder %s66, %s68
      %p75 = scmp.eq.s32.totalorder %s25, 3
      %p76 = por %p74, %p75
      %p77 = scmp.ne.s32.totalorder %s68, %s69
      %p78 = scmp.eq.s32.totalorder %s25, 0
      %p79 = por %p77, %p78
      %p80 = scmp.ne.s32.totalorder %s68, %s69
      %p81 = scmp.eq.s32.totalorder %s26, 3
      %p82 = por %p80, %p81
      %p84 = scmp.ne.s32.totalorder %s69, %s83
      %p85 = scmp.eq.s32.totalorder %s26, 0
      %p86 = por %p84, %p85
      %s88 = sadd.s32 %s87, 1
      %p91 = scmp.eq.s32.totalorder %s20, 3
      %p92 = scmp.ne.s32.totalorder %s87, %s89
      %p93 = scmp.eq.s32.totalorder %s20, 0
      %p94 = por %p92, %p93
      %p95 = scmp.ne.s32.totalorder %s87, %s89
      %p96 = scmp.eq.s32.totalorder %s25, 3
      %p97 = por %p95, %p96
      %p98 = scmp.ne.s32.totalorder %s89, %s90
      %p99 = scmp.eq.s32.totalorder %s25, 0
      %p100 = por %p98, %p99
      %p101 = scmp.ne.s32.totalorder %s89, %s90
      %p102 = scmp.eq.s32.totalorder %s26, 3
      %p103 = por %p101, %p102
      %p105 = scmp.ne.s32.totalorder %s90, %s104
      %p106 = scmp.eq.s32.totalorder %s26, 0
      %p107 = por %p105, %p106
      %s109 = sadd.s32 %s108, 1
      %p112 = scmp.eq.s32.totalorder %s20, 3
      %p113 = scmp.ne.s32.totalorder %s108, %s110
      %p114 = scmp.eq.s32.totalorder %s20, 0
      %p115 = por %p113, %p114
      %p116 = scmp.ne.s32.totalorder %s108, %s110
      %p117 = scmp.eq.s32.totalorder %s25, 3
      %p118 = por %p116, %p117
      %p119 = scmp.ne.s32.totalorder %s110, %s111
      %p120 = scmp.eq.s32.totalorder %s25, 0
      %p121 = por %p119, %p120
      %p122 = scmp.ne.s32.totalorder %s110, %s111
      %p123 = scmp.eq.s32.totalorder %s26, 3
      %p124 = por %p122, %p123
      %p126 = scmp.ne.s32.totalorder %s111, %s125
      %p127 = scmp.eq.s32.totalorder %s26, 0
      %p128 = por %p126, %p127
      %s130 = sadd.s32 %s129, 1
      %p133 = scmp.eq.s32.totalorder %s20, 3
      %p134 = scmp.ne.s32.totalorder %s129, %s131
      %p135 = scmp.eq.s32.totalorder %s20, 0
      %p136 = por %p134, %p135
      %p137 = scmp.ne.s32.totalorder %s129, %s131
      %p138 = scmp.eq.s32.totalorder %s25, 3
      %p139 = por %p137, %p138
      %p140 = scmp.ne.s32.totalorder %s131, %s132
      %p141 = scmp.eq.s32.totalorder %s25, 0
      %p142 = por %p140, %p141
      %p143 = scmp.ne.s32.totalorder %s131, %s132
      %p144 = scmp.eq.s32.totalorder %s26, 3
      %p145 = por %p143, %p144
      %p147 = scmp.ne.s32.totalorder %s132, %s146
      %p148 = scmp.eq.s32.totalorder %s26, 0
      %p149 = por %p147, %p148
      %s151 = sadd.s32 %s150, 1
      %p154 = scmp.eq.s32.totalorder %s20, 3
      %p155 = scmp.ne.s32.totalorder %s150, %s152
      %p156 = scmp.eq.s32.totalorder %s20, 0
      %p157 = por %p155, %p156
      %p158 = scmp.ne.s32.totalorder %s150, %s152
      %p159 = scmp.eq.s32.totalorder %s25, 3
      %p160 = por %p158, %p159
      %p161 = scmp.ne.s32.totalorder %s152, %s153
      %p162 = scmp.eq.s32.totalorder %s25, 0
      %p163 = por %p161, %p162
      %p164 = scmp.ne.s32.totalorder %s152, %s153
      %p165 = scmp.eq.s32.totalorder %s26, 3
      %p166 = por %p164, %p165
      %p168 = scmp.ne.s32.totalorder %s153, %s167
      %p169 = scmp.eq.s32.totalorder %s26, 0
      %p170 = por %p168, %p169
      %s172 = sadd.s32 %s171, 1
      %p175 = scmp.eq.s32.totalorder %s20, 3
      %p176 = scmp.ne.s32.totalorder %s171, %s173
      %p177 = scmp.eq.s32.totalorder %s20, 0
      %p178 = por %p176, %p177
      %p179 = scmp.ne.s32.totalorder %s171, %s173
      %p180 = scmp.eq.s32.totalorder %s25, 3
      %p181 = por %p179, %p180
      %p182 = scmp.ne.s32.totalorder %s173, %s174
      %p183 = scmp.eq.s32.totalorder %s25, 0
      %p184 = por %p182, %p183
      %p185 = scmp.ne.s32.totalorder %s173, %s174
      %p186 = scmp.eq.s32.totalorder %s26, 3
      %p187 = por %p185, %p186
      %p189 = scmp.ne.s32.totalorder %s174, %s188
      %p190 = scmp.eq.s32.totalorder %s26, 0
      %p191 = por %p189, %p190
      %s193 = sadd.s32 %s192, 1
      %p196 = scmp.eq.s32.totalorder %s20, 3
      %p197 = scmp.ne.s32.totalorder %s192, %s194
      %p198 = scmp.eq.s32.totalorder %s20, 0
      %p199 = por %p197, %p198
      %p200 = scmp.ne.s32.totalorder %s192, %s194
      %p201 = scmp.eq.s32.totalorder %s25, 3
      %p202 = por %p200, %p201
      %p203 = scmp.ne.s32.totalorder %s194, %s195
      %p204 = scmp.eq.s32.totalorder %s25, 0
      %p205 = por %p203, %p204
      %p206 = scmp.ne.s32.totalorder %s194, %s195
      %p207 = scmp.eq.s32.totalorder %s26, 3
      %p208 = por %p206, %p207
      %p210 = scmp.ne.s32.totalorder %s195, %s209
      %p211 = scmp.eq.s32.totalorder %s26, 0
      %p212 = por %p210, %p211
      %s214 = sadd.s32 %s213, 1
      %p217 = scmp.eq.s32.totalorder %s20, 3
      %p218 = scmp.ne.s32.totalorder %s213, %s215
      %p219 = scmp.eq.s32.totalorder %s20, 0
      %p220 = por %p218, %p219
      %p221 = scmp.ne.s32.totalorder %s213, %s215
      %p222 = scmp.eq.s32.totalorder %s25, 3
      %p223 = por %p221, %p222
      %p224 = scmp.ne.s32.totalorder %s215, %s216
      %p225 = scmp.eq.s32.totalorder %s25, 0
      %p226 = por %p224, %p225
      %p227 = scmp.ne.s32.totalorder %s215, %s216
      %p228 = scmp.eq.s32.totalorder %s26, 3
      %p229 = por %p227, %p228
      %p231 = scmp.ne.s32.totalorder %s216, %s230
      %p232 = scmp.eq.s32.totalorder %s26, 0
      %p233 = por %p231, %p232
      %s234 = ssub.s32 %s27, %s39
      %p235 = scmp.eq.s32.totalorder %s234, 0
      %s237 = sadd.s32 %s236, 1
      %s238 = scalar_select %p235, %s236, %s237
      %p241 = pneg %p235
      %p242 = scmp.eq.s32.totalorder %s20, 3
      %p243 = por %p241, %p242
      %p244 = scmp.ne.s32.totalorder %s236, %s239
      %p245 = scmp.eq.s32.totalorder %s20, 0
      %p246 = por %p244, %p245
      %p247 = scmp.ne.s32.totalorder %s236, %s239
      %p248 = scmp.eq.s32.totalorder %s25, 3
      %p249 = por %p247, %p248
      %p250 = scmp.ne.s32.totalorder %s239, %s240
      %p251 = scmp.eq.s32.totalorder %s25, 0
      %p252 = por %p250, %p251
      %p253 = scmp.ne.s32.totalorder %s239, %s240
      %p254 = scmp.eq.s32.totalorder %s26, 3
      %p255 = por %p253, %p254
      %p257 = scmp.ne.s32.totalorder %s240, %s256
      %p258 = scmp.eq.s32.totalorder %s26, 0
      %p259 = por %p257, %p258
      %s260 = ssub.s32 %s27, %s39
      %s261 = ssub.s32 %s28, %s35
      %s262 = sor.u32 %s260, %s261
      %p263 = scmp.eq.s32.totalorder %s262, 0
      %s265 = sadd.s32 %s264, 1
      %s266 = scalar_select %p263, %s264, %s265
      %p269 = pneg %p263
      %p270 = scmp.eq.s32.totalorder %s20, 3
      %p271 = por %p269, %p270
      %p272 = scmp.ne.s32.totalorder %s264, %s267
      %p273 = scmp.eq.s32.totalorder %s20, 0
      %p274 = por %p272, %p273
      %p275 = scmp.ne.s32.totalorder %s264, %s267
      %p276 = scmp.eq.s32.totalorder %s25, 3
      %p277 = por %p275, %p276
      %p278 = scmp.ne.s32.totalorder %s267, %s268
      %p279 = scmp.eq.s32.totalorder %s25, 0
      %p280 = por %p278, %p279
      %p281 = scmp.ne.s32.totalorder %s267, %s268
      %p282 = scmp.eq.s32.totalorder %s26, 3
      %p283 = por %p281, %p282
      %p285 = scmp.ne.s32.totalorder %s268, %s284
      %p286 = scmp.eq.s32.totalorder %s26, 0
      %p287 = por %p285, %p286
      %p288 = scmp.le.s32.totalorder 1, %s20
      %p289 = scmp.lt.s32.totalorder %s20, 5
      %p290 = pnand %p288, %p289
      %p291 = pneg %p290
      // Predicated region
      $region9: #{tpu_custom_call.1} parent=5 // pred_check
        _
      $region10: #{tpu_custom_call.1} parent=5 // pred_check_branch
        %293 = sbr.rel (%p290) target = $region12
      $region11: #{tpu_custom_call.1} parent=5 // pred_region
        %s294 = ssub.s32 %s20, 1
        // Predicated region
        $region13: #{tpu_custom_call.1} parent=11 // pred_check
          %p295 = pneg %p79
        $region14: #{tpu_custom_call.1} parent=11 // pred_check_branch
          %297 = sbr.rel (%p295) target = $region16
        $region15: #{tpu_custom_call.1} parent=11 // pred_region
          _
        $region16: #{tpu_custom_call.1} parent=11 // pred_fallthru
          _
        // Predicated region
        $region17: #{tpu_custom_call.1} parent=11 // pred_check
          %p298 = pneg %p100
        $region18: #{tpu_custom_call.1} parent=11 // pred_check_branch
          %300 = sbr.rel (%p298) target = $region20
        $region19: #{tpu_custom_call.1} parent=11 // pred_region
          _
        $region20: #{tpu_custom_call.1} parent=11 // pred_fallthru
          _
        // Predicated region
        $region21: #{tpu_custom_call.1} parent=11 // pred_check
          %p301 = pneg %p121
        $region22: #{tpu_custom_call.1} parent=11 // pred_check_branch
          %303 = sbr.rel (%p301) target = $region24
        $region23: #{tpu_custom_call.1} parent=11 // pred_region
          %s305 = ssub.s32 256, 256
          %306 = vsyncadd [#allocation5], %s305
          %s307 = sshll.u32 [#allocation4], 4
          %s308 = int_to_ptr.vmem [resolvable:$true] %s307
          %313 = dma.hbm_to_vmem [thread:$0]  %s3, 256, %s308, [#allocation5], 64, 64, 4
        $region24: #{tpu_custom_call.1} parent=11 // pred_fallthru
          _
        // Predicated region
        $region25: #{tpu_custom_call.1} parent=11 // pred_check
          %p314 = pneg %p142
        $region26: #{tpu_custom_call.1} parent=11 // pred_check_branch
          %316 = sbr.rel (%p314) target = $region28
        $region27: #{tpu_custom_call.1} parent=11 // pred_region
          _
        $region28: #{tpu_custom_call.1} parent=11 // pred_fallthru
          _
        // Predicated region
        $region29: #{tpu_custom_call.1} parent=11 // pred_check
          %p317 = pneg %p163
        $region30: #{tpu_custom_call.1} parent=11 // pred_check_branch
          %319 = sbr.rel (%p317) target = $region32
        $region31: #{tpu_custom_call.1} parent=11 // pred_region
          _
        $region32: #{tpu_custom_call.1} parent=11 // pred_fallthru
          _
        // Predicated region
        $region33: #{tpu_custom_call.1} parent=11 // pred_check
          %p320 = pneg %p184
        $region34: #{tpu_custom_call.1} parent=11 // pred_check_branch
          %322 = sbr.rel (%p320) target = $region36
        $region35: #{tpu_custom_call.1} parent=11 // pred_region
          _
        $region36: #{tpu_custom_call.1} parent=11 // pred_fallthru
          _
        // Predicated region
        $region37: #{tpu_custom_call.1} parent=11 // pred_check
          %p323 = pneg %p205
        $region38: #{tpu_custom_call.1} parent=11 // pred_check_branch
          %325 = sbr.rel (%p323) target = $region40
        $region39: #{tpu_custom_call.1} parent=11 // pred_region
          _
        $region40: #{tpu_custom_call.1} parent=11 // pred_fallthru
          _
        // Predicated region
        $region41: #{tpu_custom_call.1} parent=11 // pred_check
          %p326 = pneg %p226
        $region42: #{tpu_custom_call.1} parent=11 // pred_check_branch
          %328 = sbr.rel (%p326) target = $region44
        $region43: #{tpu_custom_call.1} parent=11 // pred_region
          _
        $region44: #{tpu_custom_call.1} parent=11 // pred_fallthru
          _
      $region12: #{tpu_custom_call.1} parent=5 // pred_fallthru
        _
      %p329 = scmp.lt.s32.totalorder %s20, 4
      // Predicated region
      $region45: #{tpu_custom_call.1} parent=5 // pred_check
        %p330 = pneg %p329
      $region46: #{tpu_custom_call.1} parent=5 // pred_check_branch
        %332 = sbr.rel (%p330) target = $region48
      $region47: #{tpu_custom_call.1} parent=5 // pred_region
        // Predicated region
        $region49: #{tpu_custom_call.1} parent=47 // pred_check
          %p333 = pneg %p52
        $region50: #{tpu_custom_call.1} parent=47 // pred_check_branch
          %335 = sbr.rel (%p333) target = $region52
        $region51: #{tpu_custom_call.1} parent=47 // pred_region
          %p336 = scmp.lt.s32.totalorder %s27, 1
          %s337 = scalar_select %p336, %s27, 1
          %s338 = smul.addr %s337, 2
          %s339 = smul.addr %s338, 8
          %s340 = scalar_lea.vmem %s0, %s339
        $region52: #{tpu_custom_call.1} parent=47 // pred_fallthru
          _
        // Predicated region
        $region53: #{tpu_custom_call.1} parent=47 // pred_check
          %p341 = pneg %p246
        $region54: #{tpu_custom_call.1} parent=47 // pred_check_branch
          %343 = sbr.rel (%p341) target = $region56
        $region55: #{tpu_custom_call.1} parent=47 // pred_region
          %p344 = scmp.lt.s32.totalorder %s27, 1
          %s345 = scalar_select %p344, %s27, 1
          %s346 = smul.addr %s345, 2
          %s347 = smul.addr %s346, 8
          %s348 = scalar_lea.vmem %s9, %s347
        $region56: #{tpu_custom_call.1} parent=47 // pred_fallthru
          _
      $region48: #{tpu_custom_call.1} parent=5 // pred_fallthru
        _
      %p349 = scmp.le.s32.totalorder 1, %s20
      %p350 = scmp.lt.s32.totalorder %s20, 5
      %p351 = pnand %p349, %p350
      %p352 = pneg %p351
      // Predicated region
      $region57: #{tpu_custom_call.1} parent=5 // pred_check
        _
      $region58: #{tpu_custom_call.1} parent=5 // pred_check_branch
        %354 = sbr.rel (%p351) target = $region60
      $region59: #{tpu_custom_call.1} parent=5 // pred_region
        %s355 = ssub.s32 %s20, 1
        // Predicated region
        $region61: #{tpu_custom_call.1} parent=59 // pred_check
          %p356 = pneg %p121
        $region62: #{tpu_custom_call.1} parent=59 // pred_check_branch
          %358 = sbr.rel (%p356) target = $region64
        $region63: #{tpu_custom_call.1} parent=59 // pred_region
          %359 = dma.done [#allocation5], 256
        $region64: #{tpu_custom_call.1} parent=59 // pred_fallthru
          _
        %p360 = scmp.lt.s32.totalorder %s29, 1
        %s361 = scalar_select %p360, %s29, 1
        %s362 = smul.addr %s361, 2
        %s363 = smul.addr %s362, 8
        %s364 = scalar_lea.vmem %s0, %s363
        %p365 = pneg %p58
        %p366 = pneg %p55
        %p367 = pneg %p79
        %p368 = pneg %p76
        %p369 = pneg %p100
        %p370 = pneg %p97
        %p371 = pneg %p121
        %p372 = pneg %p118
        %p373 = pneg %p142
        %p374 = pneg %p139
        %p375 = pneg %p163
        %p376 = pneg %p160
        %p377 = pneg %p184
        %p378 = pneg %p181
        %p379 = pneg %p205
        %p380 = pneg %p202
        %p381 = pneg %p226
        %p382 = pneg %p223
        %p383 = scmp.lt.s32.totalorder %s29, 1
        %s384 = scalar_select %p383, %s29, 1
        %s385 = smul.addr %s384, 2
        %s386 = smul.addr %s385, 8
        %s387 = scalar_lea.vmem %s9, %s386
        %p388 = pneg %p252
        %p389 = pneg %p249
        %p390 = pneg %p280
        %p391 = pneg %p277
        %s392 = sand.u32 %s267, 1
        %s393 = scalar_lea.sflag [#allocation6], %s392
        %s394 = sand.u32 %s267, 1
        %s395 = smul.addr %s394, 8
        %s396 = scalar_lea.vmem [#allocation7], %s395
        %p397 = scmp.lt.s32.totalorder %s29, 1
        %s398 = scalar_select %p397, %s29, 1
        %s399 = smul.addr %s398, 2
        %s400 = smul.addr %s399, 8
        %s401 = scalar_lea.vmem %s0, %s400
        %p402 = scmp.lt.s32.totalorder %s29, 1
        %s403 = scalar_select %p402, %s29, 1
        %s404 = smul.addr %s403, 2
        %s405 = smul.addr %s404, 8
        %s406 = scalar_lea.vmem %s9, %s405
        %p408 = scmp.eq.s32.totalorder %s30, 0
        // Predicated region
        $region65: #{tpu_custom_call.1} parent=59 // pred_check
          %p409 = pneg %p408
        $region66: #{tpu_custom_call.1} parent=59 // pred_check_branch
          %411 = sbr.rel (%p409) target = $region68
        $region67: #{tpu_custom_call.1} parent=59 // pred_region
          %v412 = vld [vmem:[%s406] sm:$0xff]
          %v413 = vld [vmem:[%s406 + $0x8] sm:$0xff]
          %v414 = vrcp.pop 10000.0
          %v415 = vmul.f32 %v412, %v414
          %v416 = vmul.f32 %v413, %v414
          %v417 = vadd.f32 %v415, 1.0
          %v418 = vadd.f32 %v416, 1.0
          %v419 = vld [vmem:[%s401] sm:$0xff]
          %v420 = vld [vmem:[%s401 + $0x8] sm:$0xff]
          %v421 = vpack.c.bf16 %v420, %v419
          %v422 = vld [vmem:[#allocation4] sm:$0xf]
          %v423 = vld [vmem:[#allocation4 + $0x4] sm:$0xf]
          %v424 = vld [vmem:[#allocation4 + $0x8] sm:$0xf]
          %v425 = vld [vmem:[#allocation4 + $0xc] sm:$0xf]
          %v426 = vld [vmem:[%s4] sm:$0x1]
          %v428 = vlaneseq
          %v429 = vshrl.u32 %v428, 7
          %v430 = vsub.s32 0, %v429
          %v431 = vrot.slane %v426, %v430
          %v437 = vunpack.c.l.b16 %v422
          %v438 = vunpack.c.l.b16 %v423
          %v439 = vunpack.c.l.b16 %v424
          %v440 = vunpack.c.l.b16 %v425
          %v441 = vpack.c.b16 %v438, %v437
          %v442 = vpack.c.b16 %v440, %v439
          %vm445 = vcmask 261120
          %v447 = vsel %vm445, %v421, 0
          %449 = vmatprep.subr.bf16.mxu0 0
          %450 = vmatpush1.bf16.msra.mxu0 %v441
          %451 = vmatprep.subr.bf16.mxu0 0
          %452 = vmatpush1.bf16.msra.mxu0 %v442
          %453 = vmatprep.subr.bf16.mxu0 0
          %454 = vmatpush1.bf16.msra.mxu0 0
          %455 = vmatprep.subr.bf16.mxu0 0
          %456 = vmatpush1.bf16.msra.mxu0 0
          %457 = vmatprep.subr.bf16.mxu0 0
          %458 = vmatpush1.bf16.msra.mxu0 0
          %459 = vmatprep.subr.bf16.mxu0 0
          %460 = vmatpush1.bf16.msra.mxu0 0
          %461 = vmatprep.subr.bf16.mxu0 0
          %462 = vmatpush1.bf16.msra.mxu0 0
          %463 = vmatprep.subr.bf16.mxu0 0
          %464 = vmatpush1.bf16.msra.mxu0 0
          %465 = vmatprep.subr.bf16.mxu0 0
          %466 = vmatpush1.bf16.msra.mxu0 0
          %467 = vmatprep.subr.bf16.mxu0 0
          %468 = vmatpush1.bf16.msra.mxu0 0
          %469 = vmatprep.subr.bf16.mxu0 0
          %470 = vmatpush1.bf16.msra.mxu0 0
          %471 = vmatprep.subr.bf16.mxu0 0
          %472 = vmatpush1.bf16.msra.mxu0 0
          %473 = vmatprep.subr.bf16.mxu0 0
          %474 = vmatpush1.bf16.msra.mxu0 0
          %475 = vmatprep.subr.bf16.mxu0 0
          %476 = vmatpush1.bf16.msra.mxu0 0
          %477 = vmatprep.subr.bf16.mxu0 0
          %478 = vmatpush1.bf16.msra.mxu0 0
          %479 = vmatprep.subr.bf16.mxu0 0
          %480 = vmatpush1.bf16.msra.mxu0 0
          %481 = vmatprep.mubr.bf16.mxu0 0
          %482 = vmatmul.mubr.bf16.gmra.mrb[0].mxu0 %v447
          %v483 = vpop.f32.mrb[0].mxu0
          %v484 = vadd.f32 %v431, %v483
          %v485 = vpop.f32.mrb[0].mxu0
          %v486 = vpop.f32.mrb[0].mxu0
          %v487 = vadd.f32 %v431, %v486
          %v488 = vpop.f32.mrb[0].mxu0
          %489 = vdwg.mxu0
          %491 = vset.pattern.permute.xlu0 0
          %492 = vperm.xlu0 %491, %v417
          %v493 = vpop.permute.xlu0 %492
          %496 = vset.pattern.permute.xlu0 0
          %497 = vperm.xlu0 %496, %v418
          %v498 = vpop.permute.xlu0 %497
          %v500 = vmul.f32 %v484, %v493
          %v501 = vmul.f32 %v487, %v498
          %v502 = vld [vmem:[%s5] sm:$0xf]
          %v503 = vpack.c.bf16 %v501, %v500
          %v504 = vld [vmem:[%s6] sm:$0xff]
          %506 = vset.pattern.permute.xlu0 0
          %507 = vperm.xlu0 %506, %v504
          %v508 = vpop.permute.xlu0 %507
          %vm510 = vcmask 130048
          %v512 = vsel %vm510, %v502, 0
          %514 = vmatprep.subr.bf16.mxu0 0
          %515 = vmatpush1.bf16.msra.mxu0 %v503
          %516 = vmatprep.subr.bf16.mxu0 0
          %517 = vmatpush1.bf16.msra.mxu0 0
          %518 = vmatprep.subr.bf16.mxu0 0
          %519 = vmatpush1.bf16.msra.mxu0 0
          %520 = vmatprep.subr.bf16.mxu0 0
          %521 = vmatpush1.bf16.msra.mxu0 0
          %522 = vmatprep.subr.bf16.mxu0 0
          %523 = vmatpush1.bf16.msra.mxu0 0
          %524 = vmatprep.subr.bf16.mxu0 0
          %525 = vmatpush1.bf16.msra.mxu0 0
          %526 = vmatprep.subr.bf16.mxu0 0
          %527 = vmatpush1.bf16.msra.mxu0 0
          %528 = vmatprep.subr.bf16.mxu0 0
          %529 = vmatpush1.bf16.msra.mxu0 0
          %530 = vmatprep.subr.bf16.mxu0 0
          %531 = vmatpush1.bf16.msra.mxu0 0
          %532 = vmatprep.subr.bf16.mxu0 0
          %533 = vmatpush1.bf16.msra.mxu0 0
          %534 = vmatprep.subr.bf16.mxu0 0
          %535 = vmatpush1.bf16.msra.mxu0 0
          %536 = vmatprep.subr.bf16.mxu0 0
          %537 = vmatpush1.bf16.msra.mxu0 0
          %538 = vmatprep.subr.bf16.mxu0 0
          %539 = vmatpush1.bf16.msra.mxu0 0
          %540 = vmatprep.subr.bf16.mxu0 0
          %541 = vmatpush1.bf16.msra.mxu0 0
          %542 = vmatprep.subr.bf16.mxu0 0
          %543 = vmatpush1.bf16.msra.mxu0 0
          %544 = vmatprep.subr.bf16.mxu0 0
          %545 = vmatpush1.bf16.msra.mxu0 0
          %546 = vmatprep.mubr.bf16.mxu0 0
          %547 = vmatmul.mubr.bf16.gmra.mrb[0].mxu0 %v512
          %v548 = vpop.f32.mrb[0].mxu0
          %v549 = vadd.f32 %v508, %v548
          %v550 = vpop.f32.mrb[0].mxu0
          %v551 = vpop.f32.mrb[0].mxu0
          %v552 = vpop.f32.mrb[0].mxu0
          %553 = vdwg.mxu0
          %v554 = vld [vmem:[%s7] sm:$0xf]
          %v555 = vpack.c.bf16 %v487, %v484
          %v556 = vld [vmem:[%s8] sm:$0xff]
          %558 = vset.pattern.permute.xlu0 0
          %559 = vperm.xlu0 %558, %v556
          %v560 = vpop.permute.xlu0 %559
          %563 = vrot.lane.b32.xlu0 %v555, 96
          %v564 = vpop.permute.xlu0 %563
          %v567 = vsel %vm510, %v554, 0
          %569 = vmatprep.subr.bf16.mxu0 0
          %570 = vmatpush1.bf16.msra.mxu0 %v564
          %571 = vmatprep.subr.bf16.mxu0 0
          %572 = vmatpush1.bf16.msra.mxu0 0
          %573 = vmatprep.subr.bf16.mxu0 0
          %574 = vmatpush1.bf16.msra.mxu0 0
          %575 = vmatprep.subr.bf16.mxu0 0
          %576 = vmatpush1.bf16.msra.mxu0 0
          %577 = vmatprep.subr.bf16.mxu0 0
          %578 = vmatpush1.bf16.msra.mxu0 0
          %579 = vmatprep.subr.bf16.mxu0 0
          %580 = vmatpush1.bf16.msra.mxu0 0
          %581 = vmatprep.subr.bf16.mxu0 0
          %582 = vmatpush1.bf16.msra.mxu0 0
          %583 = vmatprep.subr.bf16.mxu0 0
          %584 = vmatpush1.bf16.msra.mxu0 0
          %585 = vmatprep.subr.bf16.mxu0 0
          %586 = vmatpush1.bf16.msra.mxu0 0
          %587 = vmatprep.subr.bf16.mxu0 0
          %588 = vmatpush1.bf16.msra.mxu0 0
          %589 = vmatprep.subr.bf16.mxu0 0
          %590 = vmatpush1.bf16.msra.mxu0 0
          %591 = vmatprep.subr.bf16.mxu0 0
          %592 = vmatpush1.bf16.msra.mxu0 0
          %593 = vmatprep.subr.bf16.mxu0 0
          %594 = vmatpush1.bf16.msra.mxu0 0
          %595 = vmatprep.subr.bf16.mxu0 0
          %596 = vmatpush1.bf16.msra.mxu0 0
          %597 = vmatprep.subr.bf16.mxu0 0
          %598 = vmatpush1.bf16.msra.mxu0 0
          %599 = vmatprep.subr.bf16.mxu0 0
          %600 = vmatpush1.bf16.msra.mxu0 0
          %601 = vmatprep.mubr.bf16.mxu0 0
          %602 = vmatmul.mubr.bf16.gmra.mrb[0].mxu0 %v567
          %v603 = vpop.f32.mrb[0].mxu0
          %v604 = vadd.f32 %v560, %v603
          %v605 = vpop.f32.mrb[0].mxu0
          %v606 = vpop.f32.mrb[0].mxu0
          %v607 = vpop.f32.mrb[0].mxu0
          %608 = vdwg.mxu0
          %610 = vrot.lane.b32.xlu0 %v549, 120
          %v611 = vpop.permute.xlu0 %610
          %613 = vrot.lane.b32.xlu0 %v549, 112
          %v614 = vpop.permute.xlu0 %613
          %616 = vrot.lane.b32.xlu0 %v549, 104
          %v617 = vpop.permute.xlu0 %616
          %v619 = vcombine.low %v549, %v614
          %v620 = vcombine.high %v549, %v614
          %v622 = vunpack.c.l.s4 1983009808
          %v623 = vunpack.c.0.s8 %v622
          %v624 = vlaneseq
          %v625 = vshrl.u32 %v624, 7
          %v626 = vsub.s32 %v623, %v625
          %v627 = vrot.slane %v619, %v626
          %v629 = vunpack.c.l.s4 1983009808
          %v630 = vunpack.c.0.s8 %v629
          %v631 = vlaneseq
          %v632 = vshrl.u32 %v631, 7
          %v633 = vsub.s32 %v630, %v632
          %v634 = vrot.slane %v620, %v633
          %v635 = vcombine.low %v611, %v617
          %v636 = vcombine.high %v611, %v617
          %v638 = vunpack.c.l.s4 1983009808
          %v639 = vunpack.c.0.s8 %v638
          %v640 = vlaneseq
          %v641 = vshrl.u32 %v640, 7
          %v642 = vsub.s32 %v639, %v641
          %v643 = vrot.slane %v635, %v642
          %v645 = vunpack.c.l.s4 1983009808
          %v646 = vunpack.c.0.s8 %v645
          %v647 = vlaneseq
          %v648 = vshrl.u32 %v647, 7
          %v649 = vsub.s32 %v646, %v648
          %v650 = vrot.slane %v636, %v649
          %v651 = vcombine.low %v627, %v643
          %v652 = vcombine.high %v627, %v643
          %v654 = vunpack.c.l.s4 1934713408
          %v655 = vunpack.c.0.s8 %v654
          %v656 = vlaneseq
          %v657 = vshrl.u32 %v656, 7
          %v658 = vsub.s32 %v655, %v657
          %v659 = vrot.slane %v651, %v658
          %v661 = vunpack.c.l.s4 1934713408
          %v662 = vunpack.c.0.s8 %v661
          %v663 = vlaneseq
          %v664 = vshrl.u32 %v663, 7
          %v665 = vsub.s32 %v662, %v664
          %v666 = vrot.slane %v652, %v665
          %v667 = vcombine.low %v634, %v650
          %v668 = vcombine.high %v634, %v650
          %v670 = vunpack.c.l.s4 1934713408
          %v671 = vunpack.c.0.s8 %v670
          %v672 = vlaneseq
          %v673 = vshrl.u32 %v672, 7
          %v674 = vsub.s32 %v671, %v673
          %v675 = vrot.slane %v667, %v674
          %v677 = vunpack.c.l.s4 1934713408
          %v678 = vunpack.c.0.s8 %v677
          %v679 = vlaneseq
          %v680 = vshrl.u32 %v679, 7
          %v681 = vsub.s32 %v678, %v680
          %v682 = vrot.slane %v668, %v681
          %v683 = vcombine.high %v659, 0.0
          %v684 = vcombine.high %v666, 0.0
          %v685 = vcombine.high %v675, 0.0
          %v686 = vcombine.high %v682, 0.0
          %v687 = vcombine.low %v659, %v666
          %v689 = vunpack.c.l.s4 1983009808
          %v690 = vunpack.c.0.s8 %v689
          %v691 = vlaneseq
          %v692 = vshrl.u32 %v691, 7
          %v693 = vsub.s32 %v690, %v692
          %v694 = vrot.slane %v687, %v693
          %v695 = vcombine.low %v683, %v684
          %v697 = vunpack.c.l.s4 1983009808
          %v698 = vunpack.c.0.s8 %v697
          %v699 = vlaneseq
          %v700 = vshrl.u32 %v699, 7
          %v701 = vsub.s32 %v698, %v700
          %v702 = vrot.slane %v695, %v701
          %v703 = vcombine.low %v675, %v682
          %v705 = vunpack.c.l.s4 1983009808
          %v706 = vunpack.c.0.s8 %v705
          %v707 = vlaneseq
          %v708 = vshrl.u32 %v707, 7
          %v709 = vsub.s32 %v706, %v708
          %v710 = vrot.slane %v703, %v709
          %v711 = vcombine.low %v685, %v686
          %v713 = vunpack.c.l.s4 1983009808
          %v714 = vunpack.c.0.s8 %v713
          %v715 = vlaneseq
          %v716 = vshrl.u32 %v715, 7
          %v717 = vsub.s32 %v714, %v716
          %v718 = vrot.slane %v711, %v717
          %v719 = vcombine.low %v694, %v702
          %v720 = vcombine.high %v694, %v702
          %v722 = vunpack.c.l.s4 1934713408
          %v723 = vunpack.c.0.s8 %v722
          %v724 = vlaneseq
          %v725 = vshrl.u32 %v724, 7
          %v726 = vsub.s32 %v723, %v725
          %v727 = vrot.slane %v719, %v726
          %v729 = vunpack.c.l.s4 1934713408
          %v730 = vunpack.c.0.s8 %v729
          %v731 = vlaneseq
          %v732 = vshrl.u32 %v731, 7
          %v733 = vsub.s32 %v730, %v732
          %v734 = vrot.slane %v720, %v733
          %v735 = vcombine.low %v710, %v718
          %v736 = vcombine.high %v710, %v718
          %v738 = vunpack.c.l.s4 1934713408
          %v739 = vunpack.c.0.s8 %v738
          %v740 = vlaneseq
          %v741 = vshrl.u32 %v740, 7
          %v742 = vsub.s32 %v739, %v741
          %v743 = vrot.slane %v735, %v742
          %v745 = vunpack.c.l.s4 1934713408
          %v746 = vunpack.c.0.s8 %v745
          %v747 = vlaneseq
          %v748 = vshrl.u32 %v747, 7
          %v749 = vsub.s32 %v746, %v748
          %v750 = vrot.slane %v736, %v749
          %v751 = vcombine.low %v727, %v743
          %v752 = vcombine.high %v727, %v743
          %v753 = vcombine.low %v734, %v750
          %v754 = vcombine.high %v734, %v750
          %v755 = vpack.c.bf16 %v751, %v751
          %v756 = vpack.c.bf16 %v752, %v752
          %v757 = vpack.c.bf16 %v753, %v753
          %v758 = vpack.c.bf16 %v754, %v754
          %vm759 = vcmask 60416
          %760 = vst.msk [vmem:[#allocation2] sm:$0xf] %vm759, %v755
          %761 = vst.msk [vmem:[#allocation2 + $0x4] sm:$0xf] %vm759, %v756
          %762 = vst.msk [vmem:[#allocation2 + $0x8] sm:$0xf] %vm759, %v757
          %763 = vst.msk [vmem:[#allocation2 + $0xc] sm:$0xf] %vm759, %v758
          %765 = vrot.lane.b32.xlu0 %v604, 120
          %v766 = vpop.permute.xlu0 %765
          %768 = vrot.lane.b32.xlu0 %v604, 112
          %v769 = vpop.permute.xlu0 %768
          %771 = vrot.lane.b32.xlu0 %v604, 104
          %v772 = vpop.permute.xlu0 %771
          %v774 = vcombine.low %v604, %v769
          %v775 = vcombine.high %v604, %v769
          %v777 = vunpack.c.l.s4 1983009808
          %v778 = vunpack.c.0.s8 %v777
          %v779 = vlaneseq
          %v780 = vshrl.u32 %v779, 7
          %v781 = vsub.s32 %v778, %v780
          %v782 = vrot.slane %v774, %v781
          %v784 = vunpack.c.l.s4 1983009808
          %v785 = vunpack.c.0.s8 %v784
          %v786 = vlaneseq
          %v787 = vshrl.u32 %v786, 7
          %v788 = vsub.s32 %v785, %v787
          %v789 = vrot.slane %v775, %v788
          %v790 = vcombine.low %v766, %v772
          %v791 = vcombine.high %v766, %v772
          %v793 = vunpack.c.l.s4 1983009808
          %v794 = vunpack.c.0.s8 %v793
          %v795 = vlaneseq
          %v796 = vshrl.u32 %v795, 7
          %v797 = vsub.s32 %v794, %v796
          %v798 = vrot.slane %v790, %v797
          %v800 = vunpack.c.l.s4 1983009808
          %v801 = vunpack.c.0.s8 %v800
          %v802 = vlaneseq
          %v803 = vshrl.u32 %v802, 7
          %v804 = vsub.s32 %v801, %v803
          %v805 = vrot.slane %v791, %v804
          %v806 = vcombine.low %v782, %v798
          %v807 = vcombine.high %v782, %v798
          %v809 = vunpack.c.l.s4 1934713408
          %v810 = vunpack.c.0.s8 %v809
          %v811 = vlaneseq
          %v812 = vshrl.u32 %v811, 7
          %v813 = vsub.s32 %v810, %v812
          %v814 = vrot.slane %v806, %v813
          %v816 = vunpack.c.l.s4 1934713408
          %v817 = vunpack.c.0.s8 %v816
          %v818 = vlaneseq
          %v819 = vshrl.u32 %v818, 7
          %v820 = vsub.s32 %v817, %v819
          %v821 = vrot.slane %v807, %v820
          %v822 = vcombine.low %v789, %v805
          %v823 = vcombine.high %v789, %v805
          %v825 = vunpack.c.l.s4 1934713408
          %v826 = vunpack.c.0.s8 %v825
          %v827 = vlaneseq
          %v828 = vshrl.u32 %v827, 7
          %v829 = vsub.s32 %v826, %v828
          %v830 = vrot.slane %v822, %v829
          %v832 = vunpack.c.l.s4 1934713408
          %v833 = vunpack.c.0.s8 %v832
          %v834 = vlaneseq
          %v835 = vshrl.u32 %v834, 7
          %v836 = vsub.s32 %v833, %v835
          %v837 = vrot.slane %v823, %v836
          %v838 = vcombine.high %v814, 0.0
          %v839 = vcombine.high %v821, 0.0
          %v840 = vcombine.high %v830, 0.0
          %v841 = vcombine.high %v837, 0.0
          %v842 = vcombine.low %v814, %v821
          %v844 = vunpack.c.l.s4 1983009808
          %v845 = vunpack.c.0.s8 %v844
          %v846 = vlaneseq
          %v847 = vshrl.u32 %v846, 7
          %v848 = vsub.s32 %v845, %v847
          %v849 = vrot.slane %v842, %v848
          %v850 = vcombine.low %v838, %v839
          %v852 = vunpack.c.l.s4 1983009808
          %v853 = vunpack.c.0.s8 %v852
          %v854 = vlaneseq
          %v855 = vshrl.u32 %v854, 7
          %v856 = vsub.s32 %v853, %v855
          %v857 = vrot.slane %v850, %v856
          %v858 = vcombine.low %v830, %v837
          %v860 = vunpack.c.l.s4 1983009808
          %v861 = vunpack.c.0.s8 %v860
          %v862 = vlaneseq
          %v863 = vshrl.u32 %v862, 7
          %v864 = vsub.s32 %v861, %v863
          %v865 = vrot.slane %v858, %v864
          %v866 = vcombine.low %v840, %v841
          %v868 = vunpack.c.l.s4 1983009808
          %v869 = vunpack.c.0.s8 %v868
          %v870 = vlaneseq
          %v871 = vshrl.u32 %v870, 7
          %v872 = vsub.s32 %v869, %v871
          %v873 = vrot.slane %v866, %v872
          %v874 = vcombine.low %v849, %v857
          %v875 = vcombine.high %v849, %v857
          %v877 = vunpack.c.l.s4 1934713408
          %v878 = vunpack.c.0.s8 %v877
          %v879 = vlaneseq
          %v880 = vshrl.u32 %v879, 7
          %v881 = vsub.s32 %v878, %v880
          %v882 = vrot.slane %v874, %v881
          %v884 = vunpack.c.l.s4 1934713408
          %v885 = vunpack.c.0.s8 %v884
          %v886 = vlaneseq
          %v887 = vshrl.u32 %v886, 7
          %v888 = vsub.s32 %v885, %v887
          %v889 = vrot.slane %v875, %v888
          %v890 = vcombine.low %v865, %v873
          %v891 = vcombine.high %v865, %v873
          %v893 = vunpack.c.l.s4 1934713408
          %v894 = vunpack.c.0.s8 %v893
          %v895 = vlaneseq
          %v896 = vshrl.u32 %v895, 7
          %v897 = vsub.s32 %v894, %v896
          %v898 = vrot.slane %v890, %v897
          %v900 = vunpack.c.l.s4 1934713408
          %v901 = vunpack.c.0.s8 %v900
          %v902 = vlaneseq
          %v903 = vshrl.u32 %v902, 7
          %v904 = vsub.s32 %v901, %v903
          %v905 = vrot.slane %v891, %v904
          %v906 = vcombine.low %v882, %v898
          %v907 = vcombine.high %v882, %v898
          %v908 = vcombine.low %v889, %v905
          %v909 = vcombine.high %v889, %v905
          %v910 = vpack.c.bf16 %v906, %v906
          %v911 = vpack.c.bf16 %v907, %v907
          %v912 = vpack.c.bf16 %v908, %v908
          %v913 = vpack.c.bf16 %v909, %v909
          %914 = vst.msk [vmem:[#allocation3] sm:$0xf] %vm759, %v910
          %915 = vst.msk [vmem:[#allocation3 + $0x4] sm:$0xf] %vm759, %v911
          %916 = vst.msk [vmem:[#allocation3 + $0x8] sm:$0xf] %vm759, %v912
          %917 = vst.msk [vmem:[#allocation3 + $0xc] sm:$0xf] %vm759, %v913
        $region68: #{tpu_custom_call.1} parent=59 // pred_fallthru
          _
        %s918 = smul.u32 %s30, 8
        %s919 = scalar_lea.vmem %s406, %s918
        %v920 = vld [vmem:[%s919] sm:$0xff]
        %v921 = vrcp.pop 10000.0
        %v922 = vmul.f32 %v920, %v921
        %v923 = vadd.f32 %v922, 1.0
        %s924 = scalar_lea.vmem %s401, %s918
        %v925 = vld [vmem:[%s924] sm:$0xff]
        %v926 = vpack.c.bf16 %v925, %v925
        %v927 = vld [vmem:[%s1] sm:$0xf]
        %v928 = vld [vmem:[%s1 + $0x4] sm:$0xf]
        %v929 = vld [vmem:[%s1 + $0x8] sm:$0xf]
        %v930 = vld [vmem:[%s1 + $0xc] sm:$0xf]
        %v931 = vld [vmem:[%s2] sm:$0x1]
        %v933 = vlaneseq
        %v934 = vshrl.u32 %v933, 7
        %v935 = vsub.s32 0, %v934
        %v936 = vrot.slane %v931, %v935
        %v942 = vunpack.c.l.b16 %v927
        %v943 = vunpack.c.l.b16 %v928
        %v944 = vunpack.c.l.b16 %v929
        %v945 = vunpack.c.l.b16 %v930
        %v946 = vpack.c.b16 %v943, %v942
        %v947 = vpack.c.b16 %v945, %v944
        %vm950 = vcmask 261120
        %v952 = vsel %vm950, %v926, 0
        %954 = vmatprep.subr.bf16.mxu0 0
        %955 = vmatpush1.bf16.msra.mxu0 %v946
        %956 = vmatprep.subr.bf16.mxu0 0
        %957 = vmatpush1.bf16.msra.mxu0 %v947
        %958 = vmatprep.subr.bf16.mxu0 0
        %959 = vmatpush1.bf16.msra.mxu0 0
        %960 = vmatprep.subr.bf16.mxu0 0
        %961 = vmatpush1.bf16.msra.mxu0 0
        %962 = vmatprep.subr.bf16.mxu0 0
        %963 = vmatpush1.bf16.msra.mxu0 0
        %964 = vmatprep.subr.bf16.mxu0 0
        %965 = vmatpush1.bf16.msra.mxu0 0
        %966 = vmatprep.subr.bf16.mxu0 0
        %967 = vmatpush1.bf16.msra.mxu0 0
        %968 = vmatprep.subr.bf16.mxu0 0
        %969 = vmatpush1.bf16.msra.mxu0 0
        %970 = vmatprep.subr.bf16.mxu0 0
        %971 = vmatpush1.bf16.msra.mxu0 0
        %972 = vmatprep.subr.bf16.mxu0 0
        %973 = vmatpush1.bf16.msra.mxu0 0
        %974 = vmatprep.subr.bf16.mxu0 0
        %975 = vmatpush1.bf16.msra.mxu0 0
        %976 = vmatprep.subr.bf16.mxu0 0
        %977 = vmatpush1.bf16.msra.mxu0 0
        %978 = vmatprep.subr.bf16.mxu0 0
        %979 = vmatpush1.bf16.msra.mxu0 0
        %980 = vmatprep.subr.bf16.mxu0 0
        %981 = vmatpush1.bf16.msra.mxu0 0
        %982 = vmatprep.subr.bf16.mxu0 0
        %983 = vmatpush1.bf16.msra.mxu0 0
        %984 = vmatprep.subr.bf16.mxu0 0
        %985 = vmatpush1.bf16.msra.mxu0 0
        %986 = vmatprep.mubr.bf16.mxu0 0
        %987 = vmatmul.mubr.bf16.gmra.mrb[0].mxu0 %v952
        %v988 = vpop.f32.mrb[0].mxu0
        %v989 = vadd.f32 %v936, %v988
        %v990 = vpop.f32.mrb[0].mxu0
        %v991 = vpop.f32.mrb[0].mxu0
        %v992 = vpop.f32.mrb[0].mxu0
        %993 = vdwg.mxu0
        %995 = vset.pattern.permute.xlu0 0
        %996 = vperm.xlu0 %995, %v923
        %v997 = vpop.permute.xlu0 %996
        %v999 = vmul.f32 %v989, %v997
        %1001 = vrot.lane.b32.xlu0 %v999, 120
        %v1002 = vpop.permute.xlu0 %1001
        %1004 = vrot.lane.b32.xlu0 %v999, 112
        %v1005 = vpop.permute.xlu0 %1004
        %1007 = vrot.lane.b32.xlu0 %v999, 104
        %v1008 = vpop.permute.xlu0 %1007
        %v1010 = vcombine.low %v999, %v1005
        %v1011 = vcombine.high %v999, %v1005
        %v1013 = vunpack.c.l.s4 1983009808
        %v1014 = vunpack.c.0.s8 %v1013
        %v1015 = vlaneseq
        %v1016 = vshrl.u32 %v1015, 7
        %v1017 = vsub.s32 %v1014, %v1016
        %v1018 = vrot.slane %v1010, %v1017
        %v1020 = vunpack.c.l.s4 1983009808
        %v1021 = vunpack.c.0.s8 %v1020
        %v1022 = vlaneseq
        %v1023 = vshrl.u32 %v1022, 7
        %v1024 = vsub.s32 %v1021, %v1023
        %v1025 = vrot.slane %v1011, %v1024
        %v1026 = vcombine.low %v1002, %v1008
        %v1027 = vcombine.high %v1002, %v1008
        %v1029 = vunpack.c.l.s4 1983009808
        %v1030 = vunpack.c.0.s8 %v1029
        %v1031 = vlaneseq
        %v1032 = vshrl.u32 %v1031, 7
        %v1033 = vsub.s32 %v1030, %v1032
        %v1034 = vrot.slane %v1026, %v1033
        %v1036 = vunpack.c.l.s4 1983009808
        %v1037 = vunpack.c.0.s8 %v1036
        %v1038 = vlaneseq
        %v1039 = vshrl.u32 %v1038, 7
        %v1040 = vsub.s32 %v1037, %v1039
        %v1041 = vrot.slane %v1027, %v1040
        %v1042 = vcombine.low %v1018, %v1034
        %v1043 = vcombine.high %v1018, %v1034
        %v1045 = vunpack.c.l.s4 1934713408
        %v1046 = vunpack.c.0.s8 %v1045
        %v1047 = vlaneseq
        %v1048 = vshrl.u32 %v1047, 7
        %v1049 = vsub.s32 %v1046, %v1048
        %v1050 = vrot.slane %v1042, %v1049
        %v1052 = vunpack.c.l.s4 1934713408
        %v1053 = vunpack.c.0.s8 %v1052
        %v1054 = vlaneseq
        %v1055 = vshrl.u32 %v1054, 7
        %v1056 = vsub.s32 %v1053, %v1055
        %v1057 = vrot.slane %v1043, %v1056
        %v1058 = vcombine.low %v1025, %v1041
        %v1059 = vcombine.high %v1025, %v1041
        %v1061 = vunpack.c.l.s4 1934713408
        %v1062 = vunpack.c.0.s8 %v1061
        %v1063 = vlaneseq
        %v1064 = vshrl.u32 %v1063, 7
        %v1065 = vsub.s32 %v1062, %v1064
        %v1066 = vrot.slane %v1058, %v1065
        %v1068 = vunpack.c.l.s4 1934713408
        %v1069 = vunpack.c.0.s8 %v1068
        %v1070 = vlaneseq
        %v1071 = vshrl.u32 %v1070, 7
        %v1072 = vsub.s32 %v1069, %v1071
        %v1073 = vrot.slane %v1059, %v1072
        %v1074 = vcombine.high %v1050, 0.0
        %v1075 = vcombine.high %v1057, 0.0
        %v1076 = vcombine.high %v1066, 0.0
        %v1077 = vcombine.high %v1073, 0.0
        %v1078 = vcombine.low %v1050, %v1057
        %v1080 = vunpack.c.l.s4 1983009808
        %v1081 = vunpack.c.0.s8 %v1080
        %v1082 = vlaneseq
        %v1083 = vshrl.u32 %v1082, 7
        %v1084 = vsub.s32 %v1081, %v1083
        %v1085 = vrot.slane %v1078, %v1084
        %v1086 = vcombine.low %v1074, %v1075
        %v1088 = vunpack.c.l.s4 1983009808
        %v1089 = vunpack.c.0.s8 %v1088
        %v1090 = vlaneseq
        %v1091 = vshrl.u32 %v1090, 7
        %v1092 = vsub.s32 %v1089, %v1091
        %v1093 = vrot.slane %v1086, %v1092
        %v1094 = vcombine.low %v1066, %v1073
        %v1096 = vunpack.c.l.s4 1983009808
        %v1097 = vunpack.c.0.s8 %v1096
        %v1098 = vlaneseq
        %v1099 = vshrl.u32 %v1098, 7
        %v1100 = vsub.s32 %v1097, %v1099
        %v1101 = vrot.slane %v1094, %v1100
        %v1102 = vcombine.low %v1076, %v1077
        %v1104 = vunpack.c.l.s4 1983009808
        %v1105 = vunpack.c.0.s8 %v1104
        %v1106 = vlaneseq
        %v1107 = vshrl.u32 %v1106, 7
        %v1108 = vsub.s32 %v1105, %v1107
        %v1109 = vrot.slane %v1102, %v1108
        %v1110 = vcombine.low %v1085, %v1093
        %v1111 = vcombine.high %v1085, %v1093
        %v1113 = vunpack.c.l.s4 1934713408
        %v1114 = vunpack.c.0.s8 %v1113
        %v1115 = vlaneseq
        %v1116 = vshrl.u32 %v1115, 7
        %v1117 = vsub.s32 %v1114, %v1116
        %v1118 = vrot.slane %v1110, %v1117
        %v1120 = vunpack.c.l.s4 1934713408
        %v1121 = vunpack.c.0.s8 %v1120
        %v1122 = vlaneseq
        %v1123 = vshrl.u32 %v1122, 7
        %v1124 = vsub.s32 %v1121, %v1123
        %v1125 = vrot.slane %v1111, %v1124
        %v1126 = vcombine.low %v1101, %v1109
        %v1127 = vcombine.high %v1101, %v1109
        %v1129 = vunpack.c.l.s4 1934713408
        %v1130 = vunpack.c.0.s8 %v1129
        %v1131 = vlaneseq
        %v1132 = vshrl.u32 %v1131, 7
        %v1133 = vsub.s32 %v1130, %v1132
        %v1134 = vrot.slane %v1126, %v1133
        %v1136 = vunpack.c.l.s4 1934713408
        %v1137 = vunpack.c.0.s8 %v1136
        %v1138 = vlaneseq
        %v1139 = vshrl.u32 %v1138, 7
        %v1140 = vsub.s32 %v1137, %v1139
        %v1141 = vrot.slane %v1127, %v1140
        %v1142 = vcombine.low %v1118, %v1134
        %v1143 = vcombine.high %v1118, %v1134
        %v1144 = vcombine.low %v1125, %v1141
        %v1145 = vcombine.high %v1125, %v1141
        %v1146 = vpack.c.bf16 %v1142, %v1142
        %v1147 = vpack.c.bf16 %v1143, %v1143
        %v1148 = vpack.c.bf16 %v1144, %v1144
        %v1149 = vpack.c.bf16 %v1145, %v1145
        %v1150 = vld [vmem:[#allocation2] sm:$0xf]
        %v1151 = vld [vmem:[#allocation2 + $0x4] sm:$0xf]
        %v1152 = vld [vmem:[#allocation2 + $0x8] sm:$0xf]
        %v1153 = vld [vmem:[#allocation2 + $0xc] sm:$0xf]
        %vm1154 = vcmask 64512
        %v1156 = vsel %vm1154, %v1146, 0
        %v1159 = vsel %vm1154, %v1150, 0
        %1161 = vmatprep.subr.bf16.mxu0 0
        %1162 = vmatpush1.bf16.xpose.msra.mxu0 %v1159
        %1163 = vmatprep.subr.bf16.mxu0 0
        %1164 = vmatpush1.bf16.xpose.msra.mxu0 0
        %1165 = vmatprep.subr.bf16.mxu0 0
        %1166 = vmatpush1.bf16.xpose.msra.mxu0 0
        %1167 = vmatprep.subr.bf16.mxu0 0
        %1168 = vmatpush1.bf16.xpose.msra.mxu0 0
        %1169 = vmatprep.subr.bf16.mxu0 0
        %1170 = vmatpush1.bf16.xpose.msra.mxu0 0
        %1171 = vmatprep.subr.bf16.mxu0 0
        %1172 = vmatpush1.bf16.xpose.msra.mxu0 0
        %1173 = vmatprep.subr.bf16.mxu0 0
        %1174 = vmatpush1.bf16.xpose.msra.mxu0 0
        %1175 = vmatprep.subr.bf16.mxu0 0
        %1176 = vmatpush1.bf16.xpose.msra.mxu0 0
        %1177 = vmatprep.subr.bf16.mxu0 0
        %1178 = vmatpush1.bf16.xpose.msra.mxu0 0
        %1179 = vmatprep.subr.bf16.mxu0 0
        %1180 = vmatpush1.bf16.xpose.msra.mxu0 0
        %1181 = vmatprep.subr.bf16.mxu0 0
        %1182 = vmatpush1.bf16.xpose.msra.mxu0 0
        %1183 = vmatprep.subr.bf16.mxu0 0
        %1184 = vmatpush1.bf16.xpose.msra.mxu0 0
        %1185 = vmatprep.subr.bf16.mxu0 0
        %1186 = vmatpush1.bf16.xpose.msra.mxu0 0
        %1187 = vmatprep.subr.bf16.mxu0 0
        %1188 = vmatpush1.bf16.xpose.msra.mxu0 0
        %1189 = vmatprep.subr.bf16.mxu0 0
        %1190 = vmatpush1.bf16.xpose.msra.mxu0 0
        %1191 = vmatprep.subr.bf16.mxu0 0
        %1192 = vmatpush1.bf16.xpose.msra.mxu0 0
        %1193 = vmatprep.mubr.bf16.mxu0 0
        %1194 = vmatmul.mubr.bf16.gmra.mrb[0].mxu0 %v1156
        %v1195 = vpop.f32.mrb[0].mxu0
        %v1196 = vadd.f32 0.0, %v1195
        %v1197 = vpop.f32.mrb[0].mxu0
        %v1198 = vpop.f32.mrb[0].mxu0
        %v1199 = vpop.f32.mrb[0].mxu0
        %1200 = vdwg.mxu0
        %v1202 = vsel %vm1154, %v1147, 0
        %v1205 = vsel %vm1154, %v1151, 0
        %1207 = vmatprep.subr.bf16.mxu0 0
        %1208 = vmatpush1.bf16.xpose.msra.mxu0 %v1205
        %1209 = vmatprep.subr.bf16.mxu0 0
        %1210 = vmatpush1.bf16.xpose.msra.mxu0 0
        %1211 = vmatprep.subr.bf16.mxu0 0
        %1212 = vmatpush1.bf16.xpose.msra.mxu0 0
        %1213 = vmatprep.subr.bf16.mxu0 0
        %1214 = vmatpush1.bf16.xpose.msra.mxu0 0
        %1215 = vmatprep.subr.bf16.mxu0 0
        %1216 = vmatpush1.bf16.xpose.msra.mxu0 0
        %1217 = vmatprep.subr.bf16.mxu0 0
        %1218 = vmatpush1.bf16.xpose.msra.mxu0 0
        %1219 = vmatprep.subr.bf16.mxu0 0
        %1220 = vmatpush1.bf16.xpose.msra.mxu0 0
        %1221 = vmatprep.subr.bf16.mxu0 0
        %1222 = vmatpush1.bf16.xpose.msra.mxu0 0
        %1223 = vmatprep.subr.bf16.mxu0 0
        %1224 = vmatpush1.bf16.xpose.msra.mxu0 0
        %1225 = vmatprep.subr.bf16.mxu0 0
        %1226 = vmatpush1.bf16.xpose.msra.mxu0 0
        %1227 = vmatprep.subr.bf16.mxu0 0
        %1228 = vmatpush1.bf16.xpose.msra.mxu0 0
        %1229 = vmatprep.subr.bf16.mxu0 0
        %1230 = vmatpush1.bf16.xpose.msra.mxu0 0
        %1231 = vmatprep.subr.bf16.mxu0 0
        %1232 = vmatpush1.bf16.xpose.msra.mxu0 0
        %1233 = vmatprep.subr.bf16.mxu0 0
        %1234 = vmatpush1.bf16.xpose.msra.mxu0 0
        %1235 = vmatprep.subr.bf16.mxu0 0
        %1236 = vmatpush1.bf16.xpose.msra.mxu0 0
        %1237 = vmatprep.subr.bf16.mxu0 0
        %1238 = vmatpush1.bf16.xpose.msra.mxu0 0
        %1239 = vmatprep.mubr.bf16.mxu0 0
        %1240 = vmatmul.mubr.bf16.gmra.mrb[0].mxu0 %v1202
        %v1241 = vpop.f32.mrb[0].mxu0
        %v1242 = vadd.f32 0.0, %v1241
        %v1243 = vpop.f32.mrb[0].mxu0
        %v1244 = vpop.f32.mrb[0].mxu0
        %v1245 = vpop.f32.mrb[0].mxu0
        %1246 = vdwg.mxu0
        %v1248 = vsel %vm1154, %v1148, 0
        %v1251 = vsel %vm1154, %v1152, 0
        %1253 = vmatprep.subr.bf16.mxu0 0
        %1254 = vmatpush1.bf16.xpose.msra.mxu0 %v1251
        %1255 = vmatprep.subr.bf16.mxu0 0
        %1256 = vmatpush1.bf16.xpose.msra.mxu0 0
        %1257 = vmatprep.subr.bf16.mxu0 0
        %1258 = vmatpush1.bf16.xpose.msra.mxu0 0
        %1259 = vmatprep.subr.bf16.mxu0 0
        %1260 = vmatpush1.bf16.xpose.msra.mxu0 0
        %1261 = vmatprep.subr.bf16.mxu0 0
        %1262 = vmatpush1.bf16.xpose.msra.mxu0 0
        %1263 = vmatprep.subr.bf16.mxu0 0
        %1264 = vmatpush1.bf16.xpose.msra.mxu0 0
        %1265 = vmatprep.subr.bf16.mxu0 0
        %1266 = vmatpush1.bf16.xpose.msra.mxu0 0
        %1267 = vmatprep.subr.bf16.mxu0 0
        %1268 = vmatpush1.bf16.xpose.msra.mxu0 0
        %1269 = vmatprep.subr.bf16.mxu0 0
        %1270 = vmatpush1.bf16.xpose.msra.mxu0 0
        %1271 = vmatprep.subr.bf16.mxu0 0
        %1272 = vmatpush1.bf16.xpose.msra.mxu0 0
        %1273 = vmatprep.subr.bf16.mxu0 0
        %1274 = vmatpush1.bf16.xpose.msra.mxu0 0
        %1275 = vmatprep.subr.bf16.mxu0 0
        %1276 = vmatpush1.bf16.xpose.msra.mxu0 0
        %1277 = vmatprep.subr.bf16.mxu0 0
        %1278 = vmatpush1.bf16.xpose.msra.mxu0 0
        %1279 = vmatprep.subr.bf16.mxu0 0
        %1280 = vmatpush1.bf16.xpose.msra.mxu0 0
        %1281 = vmatprep.subr.bf16.mxu0 0
        %1282 = vmatpush1.bf16.xpose.msra.mxu0 0
        %1283 = vmatprep.subr.bf16.mxu0 0
        %1284 = vmatpush1.bf16.xpose.msra.mxu0 0
        %1285 = vmatprep.mubr.bf16.mxu0 0
        %1286 = vmatmul.mubr.bf16.gmra.mrb[0].mxu0 %v1248
        %v1287 = vpop.f32.mrb[0].mxu0
        %v1288 = vadd.f32 0.0, %v1287
        %v1289 = vpop.f32.mrb[0].mxu0
        %v1290 = vpop.f32.mrb[0].mxu0
        %v1291 = vpop.f32.mrb[0].mxu0
        %1292 = vdwg.mxu0
        %v1294 = vsel %vm1154, %v1149, 0
        %v1297 = vsel %vm1154, %v1153, 0
        %1299 = vmatprep.subr.bf16.mxu0 0
        %1300 = vmatpush1.bf16.xpose.msra.mxu0 %v1297
        %1301 = vmatprep.subr.bf16.mxu0 0
        %1302 = vmatpush1.bf16.xpose.msra.mxu0 0
        %1303 = vmatprep.subr.bf16.mxu0 0
        %1304 = vmatpush1.bf16.xpose.msra.mxu0 0
        %1305 = vmatprep.subr.bf16.mxu0 0
        %1306 = vmatpush1.bf16.xpose.msra.mxu0 0
        %1307 = vmatprep.subr.bf16.mxu0 0
        %1308 = vmatpush1.bf16.xpose.msra.mxu0 0
        %1309 = vmatprep.subr.bf16.mxu0 0
        %1310 = vmatpush1.bf16.xpose.msra.mxu0 0
        %1311 = vmatprep.subr.bf16.mxu0 0
        %1312 = vmatpush1.bf16.xpose.msra.mxu0 0
        %1313 = vmatprep.subr.bf16.mxu0 0
        %1314 = vmatpush1.bf16.xpose.msra.mxu0 0
        %1315 = vmatprep.subr.bf16.mxu0 0
        %1316 = vmatpush1.bf16.xpose.msra.mxu0 0
        %1317 = vmatprep.subr.bf16.mxu0 0
        %1318 = vmatpush1.bf16.xpose.msra.mxu0 0
        %1319 = vmatprep.subr.bf16.mxu0 0
        %1320 = vmatpush1.bf16.xpose.msra.mxu0 0
        %1321 = vmatprep.subr.bf16.mxu0 0
        %1322 = vmatpush1.bf16.xpose.msra.mxu0 0
        %1323 = vmatprep.subr.bf16.mxu0 0
        %1324 = vmatpush1.bf16.xpose.msra.mxu0 0
        %1325 = vmatprep.subr.bf16.mxu0 0
        %1326 = vmatpush1.bf16.xpose.msra.mxu0 0
        %1327 = vmatprep.subr.bf16.mxu0 0
        %1328 = vmatpush1.bf16.xpose.msra.mxu0 0
        %1329 = vmatprep.subr.bf16.mxu0 0
        %1330 = vmatpush1.bf16.xpose.msra.mxu0 0
        %1331 = vmatprep.mubr.bf16.mxu0 0
        %1332 = vmatmul.mubr.bf16.gmra.mrb[0].mxu0 %v1294
        %v1333 = vpop.f32.mrb[0].mxu0
        %v1334 = vadd.f32 0.0, %v1333
        %v1335 = vpop.f32.mrb[0].mxu0
        %v1336 = vpop.f32.mrb[0].mxu0
        %v1337 = vpop.f32.mrb[0].mxu0
        %1338 = vdwg.mxu0
        %v1339 = vsel %vm1154, %v1196, -inf
        %1340 = vmax.xlane.f32.xlu0 %v1339
        %v1341 = vpop.xlane.xlu0 %1340
        %v1342 = vsel %vm1154, %v1242, -inf
        %1343 = vmax.xlane.f32.xlu0 %v1342
        %v1344 = vpop.xlane.xlu0 %1343
        %v1345 = vsel %vm1154, %v1288, -inf
        %1346 = vmax.xlane.f32.xlu0 %v1345
        %v1347 = vpop.xlane.xlu0 %1346
        %v1348 = vsel %vm1154, %v1334, -inf
        %1349 = vmax.xlane.f32.xlu0 %v1348
        %v1350 = vpop.xlane.xlu0 %1349
        %v1351 = vsub.f32 %v1196, %v1341
        %v1352 = vsub.f32 %v1242, %v1344
        %v1353 = vsub.f32 %v1288, %v1347
        %v1354 = vsub.f32 %v1334, %v1350
        %v1355 = vmul.f32 %v1351, 1.442695
        %v1356 = vpow.pop %v1355
        %v1357 = vmul.f32 %v1352, 1.442695
        %v1358 = vpow.pop %v1357
        %v1359 = vmul.f32 %v1353, 1.442695
        %v1360 = vpow.pop %v1359
        %v1361 = vmul.f32 %v1354, 1.442695
        %v1362 = vpow.pop %v1361
        %v1363 = vsel %vm1154, %v1356, 0.0
        %1364 = vadd.xlane.f32.xlu0 %v1363
        %v1365 = vpop.xlane.xlu0 %1364
        %v1366 = vsel %vm1154, %v1358, 0.0
        %1367 = vadd.xlane.f32.xlu0 %v1366
        %v1368 = vpop.xlane.xlu0 %1367
        %v1369 = vsel %vm1154, %v1360, 0.0
        %1370 = vadd.xlane.f32.xlu0 %v1369
        %v1371 = vpop.xlane.xlu0 %1370
        %v1372 = vsel %vm1154, %v1362, 0.0
        %1373 = vadd.xlane.f32.xlu0 %v1372
        %v1374 = vpop.xlane.xlu0 %1373
        %v1375 = vrcp.pop %v1365
        %v1376 = vrcp.pop %v1368
        %v1377 = vrcp.pop %v1371
        %v1378 = vrcp.pop %v1374
        %v1379 = vmul.f32 %v1356, %v1375
        %v1380 = vmul.f32 %v1358, %v1376
        %v1381 = vmul.f32 %v1360, %v1377
        %v1382 = vmul.f32 %v1362, %v1378
        %v1383 = vpack.c.bf16 %v1379, %v1379
        %v1384 = vpack.c.bf16 %v1380, %v1380
        %v1385 = vpack.c.bf16 %v1381, %v1381
        %v1386 = vpack.c.bf16 %v1382, %v1382
        %v1387 = vld [vmem:[#allocation3] sm:$0xf]
        %v1388 = vld [vmem:[#allocation3 + $0x4] sm:$0xf]
        %v1389 = vld [vmem:[#allocation3 + $0x8] sm:$0xf]
        %v1390 = vld [vmem:[#allocation3 + $0xc] sm:$0xf]
        %v1392 = vsel %vm1154, %v1383, 0
        %vm1394 = vcmask 1043456
        %v1396 = vsel %vm1394, %v1387, 0
        %1398 = vmatprep.subr.bf16.mxu0 0
        %1399 = vmatpush1.bf16.msra.mxu0 %v1396
        %1400 = vmatprep.subr.bf16.mxu0 0
        %1401 = vmatpush1.bf16.msra.mxu0 0
        %1402 = vmatprep.subr.bf16.mxu0 0
        %1403 = vmatpush1.bf16.msra.mxu0 0
        %1404 = vmatprep.subr.bf16.mxu0 0
        %1405 = vmatpush1.bf16.msra.mxu0 0
        %1406 = vmatprep.subr.bf16.mxu0 0
        %1407 = vmatpush1.bf16.msra.mxu0 0
        %1408 = vmatprep.subr.bf16.mxu0 0
        %1409 = vmatpush1.bf16.msra.mxu0 0
        %1410 = vmatprep.subr.bf16.mxu0 0
        %1411 = vmatpush1.bf16.msra.mxu0 0
        %1412 = vmatprep.subr.bf16.mxu0 0
        %1413 = vmatpush1.bf16.msra.mxu0 0
        %1414 = vmatprep.subr.bf16.mxu0 0
        %1415 = vmatpush1.bf16.msra.mxu0 0
        %1416 = vmatprep.subr.bf16.mxu0 0
        %1417 = vmatpush1.bf16.msra.mxu0 0
        %1418 = vmatprep.subr.bf16.mxu0 0
        %1419 = vmatpush1.bf16.msra.mxu0 0
        %1420 = vmatprep.subr.bf16.mxu0 0
        %1421 = vmatpush1.bf16.msra.mxu0 0
        %1422 = vmatprep.subr.bf16.mxu0 0
        %1423 = vmatpush1.bf16.msra.mxu0 0
        %1424 = vmatprep.subr.bf16.mxu0 0
        %1425 = vmatpush1.bf16.msra.mxu0 0
        %1426 = vmatprep.subr.bf16.mxu0 0
        %1427 = vmatpush1.bf16.msra.mxu0 0
        %1428 = vmatprep.subr.bf16.mxu0 0
        %1429 = vmatpush1.bf16.msra.mxu0 0
        %1430 = vmatprep.mubr.bf16.mxu0 0
        %1431 = vmatmul.mubr.bf16.gmra.mrb[0].mxu0 %v1392
        %v1432 = vpop.f32.mrb[0].mxu0
        %v1433 = vadd.f32 0.0, %v1432
        %v1434 = vpop.f32.mrb[0].mxu0
        %v1435 = vpop.f32.mrb[0].mxu0
        %v1436 = vpop.f32.mrb[0].mxu0
        %1437 = vdwg.mxu0
        %v1439 = vsel %vm1154, %v1384, 0
        %v1442 = vsel %vm1394, %v1388, 0
        %1444 = vmatprep.subr.bf16.mxu0 0
        %1445 = vmatpush1.bf16.msra.mxu0 %v1442
        %1446 = vmatprep.subr.bf16.mxu0 0
        %1447 = vmatpush1.bf16.msra.mxu0 0
        %1448 = vmatprep.subr.bf16.mxu0 0
        %1449 = vmatpush1.bf16.msra.mxu0 0
        %1450 = vmatprep.subr.bf16.mxu0 0
        %1451 = vmatpush1.bf16.msra.mxu0 0
        %1452 = vmatprep.subr.bf16.mxu0 0
        %1453 = vmatpush1.bf16.msra.mxu0 0
        %1454 = vmatprep.subr.bf16.mxu0 0
        %1455 = vmatpush1.bf16.msra.mxu0 0
        %1456 = vmatprep.subr.bf16.mxu0 0
        %1457 = vmatpush1.bf16.msra.mxu0 0
        %1458 = vmatprep.subr.bf16.mxu0 0
        %1459 = vmatpush1.bf16.msra.mxu0 0
        %1460 = vmatprep.subr.bf16.mxu0 0
        %1461 = vmatpush1.bf16.msra.mxu0 0
        %1462 = vmatprep.subr.bf16.mxu0 0
        %1463 = vmatpush1.bf16.msra.mxu0 0
        %1464 = vmatprep.subr.bf16.mxu0 0
        %1465 = vmatpush1.bf16.msra.mxu0 0
        %1466 = vmatprep.subr.bf16.mxu0 0
        %1467 = vmatpush1.bf16.msra.mxu0 0
        %1468 = vmatprep.subr.bf16.mxu0 0
        %1469 = vmatpush1.bf16.msra.mxu0 0
        %1470 = vmatprep.subr.bf16.mxu0 0
        %1471 = vmatpush1.bf16.msra.mxu0 0
        %1472 = vmatprep.subr.bf16.mxu0 0
        %1473 = vmatpush1.bf16.msra.mxu0 0
        %1474 = vmatprep.subr.bf16.mxu0 0
        %1475 = vmatpush1.bf16.msra.mxu0 0
        %1476 = vmatprep.mubr.bf16.mxu0 0
        %1477 = vmatmul.mubr.bf16.gmra.mrb[0].mxu0 %v1439
        %v1478 = vpop.f32.mrb[0].mxu0
        %v1479 = vadd.f32 0.0, %v1478
        %v1480 = vpop.f32.mrb[0].mxu0
        %v1481 = vpop.f32.mrb[0].mxu0
        %v1482 = vpop.f32.mrb[0].mxu0
        %1483 = vdwg.mxu0
        %v1485 = vsel %vm1154, %v1385, 0
        %v1488 = vsel %vm1394, %v1389, 0
        %1490 = vmatprep.subr.bf16.mxu0 0
        %1491 = vmatpush1.bf16.msra.mxu0 %v1488
        %1492 = vmatprep.subr.bf16.mxu0 0
        %1493 = vmatpush1.bf16.msra.mxu0 0
        %1494 = vmatprep.subr.bf16.mxu0 0
        %1495 = vmatpush1.bf16.msra.mxu0 0
        %1496 = vmatprep.subr.bf16.mxu0 0
        %1497 = vmatpush1.bf16.msra.mxu0 0
        %1498 = vmatprep.subr.bf16.mxu0 0
        %1499 = vmatpush1.bf16.msra.mxu0 0
        %1500 = vmatprep.subr.bf16.mxu0 0
        %1501 = vmatpush1.bf16.msra.mxu0 0
        %1502 = vmatprep.subr.bf16.mxu0 0
        %1503 = vmatpush1.bf16.msra.mxu0 0
        %1504 = vmatprep.subr.bf16.mxu0 0
        %1505 = vmatpush1.bf16.msra.mxu0 0
        %1506 = vmatprep.subr.bf16.mxu0 0
        %1507 = vmatpush1.bf16.msra.mxu0 0
        %1508 = vmatprep.subr.bf16.mxu0 0
        %1509 = vmatpush1.bf16.msra.mxu0 0
        %1510 = vmatprep.subr.bf16.mxu0 0
        %1511 = vmatpush1.bf16.msra.mxu0 0
        %1512 = vmatprep.subr.bf16.mxu0 0
        %1513 = vmatpush1.bf16.msra.mxu0 0
        %1514 = vmatprep.subr.bf16.mxu0 0
        %1515 = vmatpush1.bf16.msra.mxu0 0
        %1516 = vmatprep.subr.bf16.mxu0 0
        %1517 = vmatpush1.bf16.msra.mxu0 0
        %1518 = vmatprep.subr.bf16.mxu0 0
        %1519 = vmatpush1.bf16.msra.mxu0 0
        %1520 = vmatprep.subr.bf16.mxu0 0
        %1521 = vmatpush1.bf16.msra.mxu0 0
        %1522 = vmatprep.mubr.bf16.mxu0 0
        %1523 = vmatmul.mubr.bf16.gmra.mrb[0].mxu0 %v1485
        %v1524 = vpop.f32.mrb[0].mxu0
        %v1525 = vadd.f32 0.0, %v1524
        %v1526 = vpop.f32.mrb[0].mxu0
        %v1527 = vpop.f32.mrb[0].mxu0
        %v1528 = vpop.f32.mrb[0].mxu0
        %1529 = vdwg.mxu0
        %v1531 = vsel %vm1154, %v1386, 0
        %v1534 = vsel %vm1394, %v1390, 0
        %1536 = vmatprep.subr.bf16.mxu0 0
        %1537 = vmatpush1.bf16.msra.mxu0 %v1534
        %1538 = vmatprep.subr.bf16.mxu0 0
        %1539 = vmatpush1.bf16.msra.mxu0 0
        %1540 = vmatprep.subr.bf16.mxu0 0
        %1541 = vmatpush1.bf16.msra.mxu0 0
        %1542 = vmatprep.subr.bf16.mxu0 0
        %1543 = vmatpush1.bf16.msra.mxu0 0
        %1544 = vmatprep.subr.bf16.mxu0 0
        %1545 = vmatpush1.bf16.msra.mxu0 0
        %1546 = vmatprep.subr.bf16.mxu0 0
        %1547 = vmatpush1.bf16.msra.mxu0 0
        %1548 = vmatprep.subr.bf16.mxu0 0
        %1549 = vmatpush1.bf16.msra.mxu0 0
        %1550 = vmatprep.subr.bf16.mxu0 0
        %1551 = vmatpush1.bf16.msra.mxu0 0
        %1552 = vmatprep.subr.bf16.mxu0 0
        %1553 = vmatpush1.bf16.msra.mxu0 0
        %1554 = vmatprep.subr.bf16.mxu0 0
        %1555 = vmatpush1.bf16.msra.mxu0 0
        %1556 = vmatprep.subr.bf16.mxu0 0
        %1557 = vmatpush1.bf16.msra.mxu0 0
        %1558 = vmatprep.subr.bf16.mxu0 0
        %1559 = vmatpush1.bf16.msra.mxu0 0
        %1560 = vmatprep.subr.bf16.mxu0 0
        %1561 = vmatpush1.bf16.msra.mxu0 0
        %1562 = vmatprep.subr.bf16.mxu0 0
        %1563 = vmatpush1.bf16.msra.mxu0 0
        %1564 = vmatprep.subr.bf16.mxu0 0
        %1565 = vmatpush1.bf16.msra.mxu0 0
        %1566 = vmatprep.subr.bf16.mxu0 0
        %1567 = vmatpush1.bf16.msra.mxu0 0
        %1568 = vmatprep.mubr.bf16.mxu0 0
        %1569 = vmatmul.mubr.bf16.gmra.mrb[0].mxu0 %v1531
        %v1570 = vpop.f32.mrb[0].mxu0
        %v1571 = vadd.f32 0.0, %v1570
        %v1572 = vpop.f32.mrb[0].mxu0
        %v1573 = vpop.f32.mrb[0].mxu0
        %v1574 = vpop.f32.mrb[0].mxu0
        %1575 = vdwg.mxu0
        %v1576 = vcombine.low %v1433, %v1525
        %v1577 = vcombine.high %v1433, %v1525
        %v1579 = vunpack.c.l.s4 1983009808
        %v1580 = vunpack.c.0.s8 %v1579
        %v1581 = vlaneseq
        %v1582 = vshrl.u32 %v1581, 7
        %v1583 = vsub.s32 %v1580, %v1582
        %v1584 = vrot.slane %v1576, %v1583
        %v1586 = vunpack.c.l.s4 1983009808
        %v1587 = vunpack.c.0.s8 %v1586
        %v1588 = vlaneseq
        %v1589 = vshrl.u32 %v1588, 7
        %v1590 = vsub.s32 %v1587, %v1589
        %v1591 = vrot.slane %v1577, %v1590
        %v1592 = vcombine.low %v1479, %v1571
        %v1593 = vcombine.high %v1479, %v1571
        %v1595 = vunpack.c.l.s4 1983009808
        %v1596 = vunpack.c.0.s8 %v1595
        %v1597 = vlaneseq
        %v1598 = vshrl.u32 %v1597, 7
        %v1599 = vsub.s32 %v1596, %v1598
        %v1600 = vrot.slane %v1592, %v1599
        %v1602 = vunpack.c.l.s4 1983009808
        %v1603 = vunpack.c.0.s8 %v1602
        %v1604 = vlaneseq
        %v1605 = vshrl.u32 %v1604, 7
        %v1606 = vsub.s32 %v1603, %v1605
        %v1607 = vrot.slane %v1593, %v1606
        %v1608 = vcombine.low %v1584, %v1600
        %v1609 = vcombine.high %v1584, %v1600
        %v1611 = vunpack.c.l.s4 1934713408
        %v1612 = vunpack.c.0.s8 %v1611
        %v1613 = vlaneseq
        %v1614 = vshrl.u32 %v1613, 7
        %v1615 = vsub.s32 %v1612, %v1614
        %v1616 = vrot.slane %v1608, %v1615
        %v1618 = vunpack.c.l.s4 1934713408
        %v1619 = vunpack.c.0.s8 %v1618
        %v1620 = vlaneseq
        %v1621 = vshrl.u32 %v1620, 7
        %v1622 = vsub.s32 %v1619, %v1621
        %v1623 = vrot.slane %v1609, %v1622
        %v1624 = vcombine.low %v1591, %v1607
        %v1625 = vcombine.high %v1591, %v1607
        %v1627 = vunpack.c.l.s4 1934713408
        %v1628 = vunpack.c.0.s8 %v1627
        %v1629 = vlaneseq
        %v1630 = vshrl.u32 %v1629, 7
        %v1631 = vsub.s32 %v1628, %v1630
        %v1632 = vrot.slane %v1624, %v1631
        %v1634 = vunpack.c.l.s4 1934713408
        %v1635 = vunpack.c.0.s8 %v1634
        %v1636 = vlaneseq
        %v1637 = vshrl.u32 %v1636, 7
        %v1638 = vsub.s32 %v1635, %v1637
        %v1639 = vrot.slane %v1625, %v1638
        %v1640 = vcombine.high %v1616, 0.0
        %v1641 = vcombine.high %v1623, 0.0
        %v1642 = vcombine.high %v1632, 0.0
        %v1643 = vcombine.high %v1639, 0.0
        %v1644 = vcombine.low %v1616, %v1623
        %v1646 = vunpack.c.l.s4 1983009808
        %v1647 = vunpack.c.0.s8 %v1646
        %v1648 = vlaneseq
        %v1649 = vshrl.u32 %v1648, 7
        %v1650 = vsub.s32 %v1647, %v1649
        %v1651 = vrot.slane %v1644, %v1650
        %v1652 = vcombine.low %v1640, %v1641
        %v1654 = vunpack.c.l.s4 1983009808
        %v1655 = vunpack.c.0.s8 %v1654
        %v1656 = vlaneseq
        %v1657 = vshrl.u32 %v1656, 7
        %v1658 = vsub.s32 %v1655, %v1657
        %v1659 = vrot.slane %v1652, %v1658
        %v1660 = vcombine.low %v1632, %v1639
        %v1662 = vunpack.c.l.s4 1983009808
        %v1663 = vunpack.c.0.s8 %v1662
        %v1664 = vlaneseq
        %v1665 = vshrl.u32 %v1664, 7
        %v1666 = vsub.s32 %v1663, %v1665
        %v1667 = vrot.slane %v1660, %v1666
        %v1668 = vcombine.low %v1642, %v1643
        %v1670 = vunpack.c.l.s4 1983009808
        %v1671 = vunpack.c.0.s8 %v1670
        %v1672 = vlaneseq
        %v1673 = vshrl.u32 %v1672, 7
        %v1674 = vsub.s32 %v1671, %v1673
        %v1675 = vrot.slane %v1668, %v1674
        %v1676 = vcombine.low %v1651, %v1659
        %v1677 = vcombine.high %v1651, %v1659
        %v1679 = vunpack.c.l.s4 1934713408
        %v1680 = vunpack.c.0.s8 %v1679
        %v1681 = vlaneseq
        %v1682 = vshrl.u32 %v1681, 7
        %v1683 = vsub.s32 %v1680, %v1682
        %v1684 = vrot.slane %v1676, %v1683
        %v1686 = vunpack.c.l.s4 1934713408
        %v1687 = vunpack.c.0.s8 %v1686
        %v1688 = vlaneseq
        %v1689 = vshrl.u32 %v1688, 7
        %v1690 = vsub.s32 %v1687, %v1689
        %v1691 = vrot.slane %v1677, %v1690
        %v1692 = vcombine.low %v1667, %v1675
        %v1693 = vcombine.high %v1667, %v1675
        %v1695 = vunpack.c.l.s4 1934713408
        %v1696 = vunpack.c.0.s8 %v1695
        %v1697 = vlaneseq
        %v1698 = vshrl.u32 %v1697, 7
        %v1699 = vsub.s32 %v1696, %v1698
        %v1700 = vrot.slane %v1692, %v1699
        %v1702 = vunpack.c.l.s4 1934713408
        %v1703 = vunpack.c.0.s8 %v1702
        %v1704 = vlaneseq
        %v1705 = vshrl.u32 %v1704, 7
        %v1706 = vsub.s32 %v1703, %v1705
        %v1707 = vrot.slane %v1693, %v1706
        %v1708 = vcombine.low %v1684, %v1700
        %v1709 = vcombine.high %v1684, %v1700
        %v1710 = vcombine.low %v1691, %v1707
        %v1711 = vcombine.high %v1691, %v1707
        %1713 = vrot.lane.b32.xlu0 %v1709, 8
        %v1714 = vpop.permute.xlu0 %1713
        %1717 = vrot.lane.b32.xlu0 %v1710, 16
        %v1718 = vpop.permute.xlu0 %1717
        %1721 = vrot.lane.b32.xlu0 %v1711, 24
        %v1722 = vpop.permute.xlu0 %1721
        %v1724 = vsel %vm1154, %v1708, %v1714
        %vm1725 = vcmask 130048
        %v1726 = vsel %vm1725, %v1724, %v1718
        %vm1727 = vcmask 195584
        %v1728 = vsel %vm1727, %v1726, %v1722
        %1729 = vst.msk [vmem:[%s396] sm:$0xff] %vm950, %v1728
        %s1730 = sand.u32 %s267, 1
        %s1731 = scalar_lea.sflag [#allocation6], %s1730
        %s1732 = sand.u32 %s267, 1
        %s1733 = smul.addr %s1732, 8
        %s1734 = scalar_lea.vmem [#allocation7], %s1733
        // Predicated region
        $region69: #{tpu_custom_call.1} parent=59 // pred_check
          %p1735 = pneg %p277
        $region70: #{tpu_custom_call.1} parent=59 // pred_check_branch
          %1737 = sbr.rel (%p1735) target = $region72
        $region71: #{tpu_custom_call.1} parent=59 // pred_region
          %s1739 = ssub.s32 128, 128
          %1740 = vsyncadd %s1731, %s1739
          %s1741 = smul.addr %s29, 2
          %s1742 = sadd.s32 %s30, %s1741
          %s1743 = smul.addr %s1742, 128
          %s1744 = scalar_lea.hbm %s10, %s1743
          %s1746 = sshll.u32 %s1734, 4
          %s1747 = int_to_ptr.vmem [resolvable:$true] %s1746
          %1749 = dma.vmem_to_hbm [thread:$0]  %s1747, 128, %s1744, %s1731
        $region72: #{tpu_custom_call.1} parent=59 // pred_fallthru
          _
      $region60: #{tpu_custom_call.1} parent=5 // pred_fallthru
        _
      %p1750 = scmp.le.s32.totalorder 2, %s20
      // Predicated region
      $region73: #{tpu_custom_call.1} parent=5 // pred_check
        %p1751 = pneg %p1750
      $region74: #{tpu_custom_call.1} parent=5 // pred_check_branch
        %1753 = sbr.rel (%p1751) target = $region76
      $region75: #{tpu_custom_call.1} parent=5 // pred_region
        %s1754 = ssub.s32 %s20, 2
        // Predicated region
        $region77: #{tpu_custom_call.1} parent=75 // pred_check
          %p1755 = pneg %p283
        $region78: #{tpu_custom_call.1} parent=75 // pred_check_branch
          %1757 = sbr.rel (%p1755) target = $region80
        $region79: #{tpu_custom_call.1} parent=75 // pred_region
          %s1758 = sand.u32 %s268, 1
          %s1759 = scalar_lea.sflag [#allocation6], %s1758
          %s1760 = sand.u32 %s268, 1
          %s1761 = smul.addr %s1760, 8
          %s1762 = scalar_lea.vmem [#allocation7], %s1761
          %1763 = dma.done %s1759, 128
        $region80: #{tpu_custom_call.1} parent=75 // pred_fallthru
          _
      $region76: #{tpu_custom_call.1} parent=5 // pred_fallthru
        _
    $region6: #{tpu_custom_call.1} parent=1 // loop_footer
      %s24 = sadd.s32 1, %s20
    $region7: #{tpu_custom_call.1} parent=1 // loop_footer_branch
      %19 = sbr.rel target = $region3
    $region8: #{tpu_custom_call.1} parent=1 // loop_exit
      _
    %1764 = vsyncpa [#allocation5], 1
    %s1765 = scalar_lea.sflag [#allocation5], 1
    %1766 = vsyncpa %s1765, 1
    %1767 = vsyncpa [#allocation6], 1
    %s1768 = scalar_lea.sflag [#allocation6], 1
    %1769 = vsyncpa %s1768, 1

</llo_original>
